<compile_context>
chip_gen: v7x
topology: tpu7x:2x2x1
jax: 0.10.0
libtpu: 0.0.40
codegen_flags: <defaults>
</compile_context>

<pallas_src>
import numpy as np
import jax
import jax.numpy as jnp
from jax.experimental import pallas as pl
from jax.experimental.pallas import tpu as pltpu

B = 2
N_POINTS = 64
IN_DIM = 6          # xyz + rgb
NPOINT = 16
NSAMPLE = 8
RADIUS = 0.3
HIDDEN = 32
NUM_CLASSES = 10

PAD_LANES = 128     # lane width of the packed parameter slab / logits output
IN_PAD = 16         # channel padding of grouped points / centroids (zero cols)
P_ROWS = 224        # packed parameter slab rows (bf16 -> 16-row aligned slots)

# Packed weight slab row offsets (all multiples of 16; rows beyond each
# weight's true Cin are zero, matching the zero-padded input channels).
W_OFF = dict(sa1_w1=0, sa1_w2=16, sa1_w3=32,
             sa2_w1a=48,    # xyz part (3 rows used) of SA2 layer-1 weight
             sa2_w1b=64,    # feature part (32 rows)
             sa2_w2=96, sa2_w3=128,
             h1c=160,       # fc folded into head linear 1
             h2c=192)       # LayerNorm gamma/beta folded into head linear 2
B_BASE = 208        # bias block: 16 rows, 16-row aligned, one bias per row
B_ROW = dict(sa1_b1=0, sa1_b2=1, sa1_b3=2, sa2_b1=3, sa2_b2=4, sa2_b3=5,
             h1c_b=6, h2c_b=7)


# ----------------------------------------------------------------------------
# Fused Pallas kernel: SA1 shared-MLP + max-pool, SA2 (GroupAll), head.
# ----------------------------------------------------------------------------
def _make_fused_kernel(Bb, P, S):
    BP = Bb * P
    G1 = S * BP

    def kernel(x_ref, p_ref, o_ref):
        # x_ref: (S*B*P + B*P, IN_PAD) f32  -- neighbor rows (neighbor idx
        #        outermost) followed by the sampled centroid rows
        # p_ref: (P_ROWS, 128) bf16         -- merged weight + bias slab
        # o_ref: (B, 128) f32               -- logits padded to 128 lanes

        # Load the whole bias block once (16-row aligned) and convert to f32.
        bias_blk = p_ref[B_BASE:B_BASE + 16, :].astype(jnp.float32)

        def wslice(name, cin, cout):
            r = W_OFF[name]
            return p_ref[r:r + cin, 0:cout]            # bf16, lane-0 aligned

        def bias(name, cout):
            r = B_ROW[name]
            return bias_blk[r:r + 1, 0:cout]            # f32 row

        def lin(x, wname, cin, cout, bname, relu=True):
            y = (jnp.dot(x.astype(jnp.bfloat16), wslice(wname, cin, cout),
                         preferred_element_type=jnp.float32)
                 + bias(bname, cout))
            return jnp.maximum(y, 0.0) if relu else y

        g1 = x_ref[0:G1, :]            # (S*B*P, IN_PAD)
        nx = x_ref[G1:G1 + BP, :]      # (B*P, IN_PAD)

        # ---- SA1: folded conv+BN+ReLU x3 over the whole neighbor slab ----
        h = lin(g1, "sa1_w1", IN_PAD, 16, "sa1_b1")
        h = lin(h, "sa1_w2", 16, 16, "sa1_b2")
        h = lin(h, "sa1_w3", 16, 32, "sa1_b3")          # (S*BP, 32)

        # Max-pool over the S neighbors: balanced tree (depth log2 S).
        blocks = [h[s * BP:(s + 1) * BP, :] for s in range(S)]
        while len(blocks) > 1:
            nxt = [jnp.maximum(blocks[i], blocks[i + 1])
                   for i in range(0, len(blocks) - 1, 2)]
            if len(blocks) % 2:
                nxt.append(blocks[-1])
            blocks = nxt
        f1 = blocks[0]                                   # (BP, 32)

        # ---- SA2 (GroupAll): concat(new_xyz, f1) @ W1 as a split matmul ----
        a2 = (jnp.dot(nx.astype(jnp.bfloat16), wslice("sa2_w1a", IN_PAD, 32),
                      preferred_element_type=jnp.float32)
              + jnp.dot(f1.astype(jnp.bfloat16), wslice("sa2_w1b", HIDDEN, 32),
                        preferred_element_type=jnp.float32)
              + bias("sa2_b1", 32))
        a2 = jnp.maximum(a2, 0.0)
        a2 = lin(a2, "sa2_w2", 32, 32, "sa2_b2")
        a2 = lin(a2, "sa2_w3", 32, 32, "sa2_b3")         # (BP, 32)

        # Per-batch max over the P sampled points, assembled in values:
        # no VMEM scratch, no store->load round-trip, no masked row stores.
        maxes = [jnp.max(a2[b * P:(b + 1) * P, :], axis=0, keepdims=True)
                 for b in range(Bb)]
        row_id = jax.lax.broadcasted_iota(jnp.int32, (Bb, HIDDEN), 0)
        f2 = jnp.broadcast_to(maxes[0], (Bb, HIDDEN))
        for b in range(1, Bb):
            f2 = jnp.where(row_id == b,
                           jnp.broadcast_to(maxes[b], (Bb, HIDDEN)), f2)

        # ---- Head: fc folded into the first head linear (dropout = identity) ----
        hh = lin(f2, "h1c", HIDDEN, HIDDEN // 2, "h1c_b")   # (B, 16)

        # LayerNorm (gamma/beta folded into the final linear at pack time).
        mu = jnp.mean(hh, axis=-1, keepdims=True)
        var = jnp.mean(jnp.square(hh - mu), axis=-1, keepdims=True)
        norm = (hh - mu) * jax.lax.rsqrt(var + 1e-12)

        # Final linear: full 128-lane zero-padded weight -> one unmasked store.
        r = W_OFF["h2c"]
        o_ref[...] = (jnp.dot(norm.astype(jnp.bfloat16),
                              p_ref[r:r + HIDDEN // 2, :],
                              preferred_element_type=jnp.float32)
                      + bias_blk[B_ROW["h2c_b"]:B_ROW["h2c_b"] + 1, :])

    return kernel


def _full_spec(shape):
    nd = len(shape)
    return pl.BlockSpec(shape, lambda i, _nd=nd: (0,) * _nd)


def fused_pcd_classifier(x, p_slab, Bb, P, S):
    """x: (S*B*P + B*P, IN_PAD) f32, p_slab: (P_ROWS,128) bf16 -> logits (B,128)."""
    # TODO(synk): for production many-object batches, add an outer "parallel"
    # grid axis over object tiles (weight slab index_map constant) to use the
    # second TensorCore on v7x and amortize launch overhead; grid=(1,) here.
    return pl.pallas_call(
        _make_fused_kernel(Bb, P, S),
        out_shape=jax.ShapeDtypeStruct((Bb, PAD_LANES), jnp.float32),
        grid_spec=pltpu.PrefetchScalarGridSpec(
            num_scalar_prefetch=0,
            grid=(1,),
            in_specs=[_full_spec(x.shape), _full_spec(p_slab.shape)],
            out_specs=pl.BlockSpec((Bb, PAD_LANES), lambda i: (0, 0)),
        ),
        compiler_params=pltpu.CompilerParams(dimension_semantics=("arbitrary",)),
    )(x, p_slab)


# ----------------------------------------------------------------------------
# Plain-JAX glue: data-dependent sampling / grouping and parameter setup.
# ----------------------------------------------------------------------------
def batched_gather(points, idx):
    # points (B, N, C), idx (B, ...) -> (B, ..., C)
    return jax.vmap(lambda p, i: p[i])(points, idx)


def farthest_point_sample(xyz, npoint):
    # TODO(synk): furthest_point_sample is a CUDA op in pointnet2; it is an
    # inherently sequential data-dependent argmax loop, kept in plain JAX.
    Bb, N, _ = xyz.shape

    def body(i, state):
        idxs, dists, farthest = state
        idxs = idxs.at[:, i].set(farthest)
        centroid = xyz[jnp.arange(Bb), farthest]                 # (B, 3)
        d = jnp.sum(jnp.square(xyz - centroid[:, None, :]), -1)  # (B, N)
        dists = jnp.minimum(dists, d)
        farthest = jnp.argmax(dists, axis=-1).astype(jnp.int32)
        return idxs, dists, farthest

    idxs = jnp.zeros((Bb, npoint), jnp.int32)
    dists = jnp.full((Bb, N), 1e10, jnp.float32)
    farthest = jnp.zeros((Bb,), jnp.int32)   # CUDA kernel also starts from index 0
    idxs, _, _ = jax.lax.fori_loop(0, npoint, body, (idxs, dists, farthest))
    return idxs


def ball_query(radius, nsample, xyz, new_xyz):
    # TODO(synk): ball_query is a CUDA op in pointnet2; done in plain JAX.
    # Sort-free: 0-based cumsum rank of in-ball points + masked one-hot select.
    N = xyz.shape[1]
    d2 = jnp.sum(jnp.square(new_xyz[:, :, None, :] - xyz[:, None, :, :]), -1)  # (B,P,N)
    in_ball = d2 < (radius * radius)
    ib = in_ball.astype(jnp.int32)
    rank = jnp.cumsum(ib, axis=-1) - ib                       # rank among in-ball pts
    slots = jnp.arange(nsample, dtype=jnp.int32)
    hit = in_ball[..., None, :] & (rank[..., None, :] == slots[:, None])   # (B,P,S,N)
    pt = jnp.arange(N, dtype=jnp.int32)
    idx = jnp.max(jnp.where(hit, pt, 0), axis=-1)             # (B,P,S)
    has = jnp.any(hit, axis=-1)
    first = idx[..., :1]                                      # first in-ball idx (or 0)
    idx = jnp.where(has, idx, first)                          # pad / empty ball -> 0
    return idx


def init_params(key):
    keys = jax.random.split(key, 12)

    def conv_bn(k, cin, cout):
        # Conv2d(1x1, bias=False) + BatchNorm2d(eval), folded into matmul W, b.
        w = jax.random.normal(k, (cin, cout), jnp.float32) * (1.0 / np.sqrt(cin))
        gamma = jnp.ones((cout,), jnp.float32)
        beta = jnp.zeros((cout,), jnp.float32)
        mean = jnp.zeros((cout,), jnp.float32)
        var = jnp.ones((cout,), jnp.float32)
        scale = gamma * jax.lax.rsqrt(var + 1e-5)
        return (w * scale[None, :], (beta - mean * scale)[None, :])

    def linear(k, cin, cout):
        kw, kb = jax.random.split(k)
        w = jax.random.normal(kw, (cin, cout), jnp.float32) * (1.0 / np.sqrt(cin))
        b = jax.random.normal(kb, (1, cout), jnp.float32) * 0.02
        return (w, b)

    sa1 = conv_bn(keys[0], 6, 16) + conv_bn(keys[1], 16, 16) + conv_bn(keys[2], 16, 32)
    sa2 = conv_bn(keys[3], 35, 32) + conv_bn(keys[4], 32, 32) + conv_bn(keys[5], 32, 32)
    fc = linear(keys[6], HIDDEN, HIDDEN)                       # PointNetPP.fc
    h1 = linear(keys[7], HIDDEN, HIDDEN // 2)
    ln = (jnp.ones((1, HIDDEN // 2), jnp.float32), jnp.zeros((1, HIDDEN // 2), jnp.float32))
    h2 = linear(keys[8], HIDDEN // 2, NUM_CLASSES)
    return {"sa1": sa1, "sa2": sa2, "head": fc + h1 + ln + h2}


def pack_params(params):
    """Pack all folded weights + biases into ONE lane-padded bf16 slab."""
    slab = np.zeros((P_ROWS, PAD_LANES), np.float32)
    s1w1, s1b1, s1w2, s1b2, s1w3, s1b3 = params["sa1"]
    s2w1, s2b1, s2w2, s2b2, s2w3, s2b3 = params["sa2"]
    fcw, fcb, h1w, h1b, gamma, beta, h2w, h2b = params["head"]

    # Fold PointNetPP.fc into the first head linear (no nonlinearity between,
    # dropout is identity in eval mode).
    h1c_w = np.asarray(fcw) @ np.asarray(h1w)
    h1c_b = np.asarray(fcb) @ np.asarray(h1w) + np.asarray(h1b)
    # Fold LayerNorm gamma/beta into the final head linear.
    h2c_w = np.asarray(gamma).reshape(-1, 1) * np.asarray(h2w)
    h2c_b = np.asarray(beta).reshape(1, -1) @ np.asarray(h2w) + np.asarray(h2b)

    def put_w(name, w):
        w = np.asarray(w, np.float32)
        r = W_OFF[name]
        slab[r:r + w.shape[0], :w.shape[1]] = w

    def put_b(name, v):
        v = np.asarray(v, np.float32).reshape(-1)
        slab[B_BASE + B_ROW[name], :v.shape[0]] = v

    put_w("sa1_w1", s1w1)                         # (6,16) -> rows 6..15 stay zero pad
    put_w("sa1_w2", s1w2); put_w("sa1_w3", s1w3)
    put_w("sa2_w1a", np.asarray(s2w1)[:3])        # xyz part of the GroupAll layer
    put_w("sa2_w1b", np.asarray(s2w1)[3:])        # feature part
    put_w("sa2_w2", s2w2); put_w("sa2_w3", s2w3)
    put_w("h1c", h1c_w); put_w("h2c", h2c_w)
    for name, v in [("sa1_b1", s1b1), ("sa1_b2", s1b2), ("sa1_b3", s1b3),
                    ("sa2_b1", s2b1), ("sa2_b2", s2b2), ("sa2_b3", s2b3),
                    ("h1c_b", h1c_b), ("h2c_b", h2c_b)]:
        put_b(name, v)
    return jnp.asarray(slab, dtype=jnp.bfloat16)


# ----------------------------------------------------------------------------
# Forward pass (one fused Pallas kernel) + pure-JAX reference
# ----------------------------------------------------------------------------
def _sample_and_group(obj_pcds):
    xyz = obj_pcds[..., :3]          # break_up_pc
    feats = obj_pcds[..., 3:]        # channels-last (B, N, 3)
    fps_idx = farthest_point_sample(xyz, NPOINT)                       # (B, P)
    new_xyz = batched_gather(xyz, fps_idx)                             # (B, P, 3)
    nbr_idx = ball_query(RADIUS, NSAMPLE, xyz, new_xyz)                # (B, P, S)
    return xyz, feats, new_xyz, nbr_idx


def _prepare_kernel_input(obj_pcds):
    """Build the single (S*B*P + B*P, IN_PAD) data slab, neighbor idx outermost."""
    xyz, feats, new_xyz, nbr_idx = _sample_and_group(obj_pcds)
    Bb, P = new_xyz.shape[:2]
    S = nbr_idx.shape[-1]
    # Gather directly into (S, B, P, C) order by transposing the (tiny) index
    # instead of transposing the gathered slab afterwards.
    idx_sbp = jnp.transpose(nbr_idx, (2, 0, 1))                        # (S, B, P)
    g_xyz = jnp.take_along_axis(xyz[None], idx_sbp[..., None], axis=2) # (S,B,P,3)
    g_feat = jnp.take_along_axis(feats[None], idx_sbp[..., None], axis=2)
    g_xyz = g_xyz - new_xyz[None]                                      # centered
    zpad = jnp.zeros((S, Bb, P, IN_PAD - 2 * 3), jnp.float32)
    g1 = jnp.concatenate([g_xyz, g_feat, zpad], axis=-1).reshape(S * Bb * P, IN_PAD)
    nx = jnp.concatenate([new_xyz.reshape(Bb * P, 3),
                          jnp.zeros((Bb * P, IN_PAD - 3), jnp.float32)], axis=-1)
    x = jnp.concatenate([g1, nx], axis=0)                              # (S*B*P+B*P, 16)
    return x, Bb, P, S


def forward(p_slab, obj_pcds):
    x, Bb, P, S = _prepare_kernel_input(obj_pcds)
    logits_pad = fused_pcd_classifier(x, p_slab, Bb, P, S)
    return logits_pad[:, :NUM_CLASSES]


def _ref_sa(grouped, w1, b1, w2, b2, w3, b3):
    h = jnp.maximum(grouped @ w1 + b1, 0.0)
    h = jnp.maximum(h @ w2 + b2, 0.0)
    h = jnp.maximum(h @ w3 + b3, 0.0)
    return jnp.max(h, axis=-2)


def _ref_head(x, fc_w, fc_b, w1, b1, gamma, beta, w2, b2):
    e = x @ fc_w + fc_b
    h = jnp.maximum(e @ w1 + b1, 0.0)
    mu = jnp.mean(h, -1, keepdims=True)
    var = jnp.mean(jnp.square(h - mu), -1, keepdims=True)
    ln = (h - mu) * jax.lax.rsqrt(var + 1e-12) * gamma + beta
    return ln @ w2 + b2


def reference_forward(params, obj_pcds):
    xyz, feats, new_xyz, nbr_idx = _sample_and_group(obj_pcds)
    g_xyz = batched_gather(xyz, nbr_idx) - new_xyz[:, :, None, :]
    g_feat = batched_gather(feats, nbr_idx)
    grouped1 = jnp.concatenate([g_xyz, g_feat], axis=-1)               # (B,P,S,6)
    f1 = _ref_sa(grouped1, *params["sa1"])                             # (B, P, 32)
    grouped2 = jnp.concatenate([new_xyz, f1], axis=-1)                 # (B, P, 35)
    f2 = _ref_sa(grouped2, *params["sa2"])                             # (B, 32)
    return _ref_head(f2, *params["head"])                              # (B, num_classes)


if __name__ == "__main__":
    key = jax.random.PRNGKey(0)
    kp, kx1, kx2 = jax.random.split(key, 3)
    params = init_params(kp)
    p_slab = pack_params(params)
    xyz = jax.random.uniform(kx1, (B, N_POINTS, 3), jnp.float32)
    rgb = jax.random.uniform(kx2, (B, N_POINTS, 3), jnp.float32)
    obj_pcds = jnp.concatenate([xyz, rgb], axis=-1)                    # (2, 64, 6)

    logits = jax.jit(lambda x: forward(p_slab, x))(obj_pcds)
    logits = jax.block_until_ready(logits)

    assert logits.shape == (B, NUM_CLASSES)
    assert bool(jnp.all(jnp.isfinite(logits)))
    ref = reference_forward(params, obj_pcds)
    # bf16 MXU weights (per perf review) introduce ~0.2-0.5% relative error vs
    # the pure-f32 reference; 2e-2 tolerance keeps the check meaningful.
    np.testing.assert_allclose(np.asarray(logits), np.asarray(ref), rtol=2e-2, atol=2e-2)

    print("KERNEL_OK")
</pallas_src>

<mosaic_0001>
module attributes {stable_mosaic.version = 11 : i64} {
  func.func @kernel(%arg0: i32, %arg1: memref<288x16xf32, #tpu.memory_space<vmem>>, %arg2: memref<224x128xbf16, #tpu.memory_space<vmem>>, %arg3: memref<2x128xf32, #tpu.memory_space<vmem>>) attributes {dimension_semantics = [#tpu.dimension_semantics<arbitrary>], iteration_bounds = array<i64: 1>, scalar_prefetch = 0 : i64, scratch_operands = 0 : i64, tpu.core_type = #tpu.core_type<tc>, window_params = [{pipeline_mode = #tpu.pipeline_mode<synchronous>, transform_indices = @transform_0, window_bounds = array<i64: 288, 16>}, {pipeline_mode = #tpu.pipeline_mode<synchronous>, transform_indices = @transform_1, window_bounds = array<i64: 224, 128>}, {pipeline_mode = #tpu.pipeline_mode<synchronous>, transform_indices = @transform_2, window_bounds = array<i64: 2, 128>}]} {
    %c208 = arith.constant 208 : index
    %c0 = arith.constant 0 : index
    %0 = vector.load %arg2[%c208, %c0] : memref<224x128xbf16, #tpu.memory_space<vmem>>, vector<16x128xbf16>
    %1 = arith.extf %0 : vector<16x128xbf16> to vector<16x128xf32>
    %c0_0 = arith.constant 0 : index
    %c0_1 = arith.constant 0 : index
    %2 = vector.load %arg1[%c0_0, %c0_1] : memref<288x16xf32, #tpu.memory_space<vmem>>, vector<256x16xf32>
    %c256 = arith.constant 256 : index
    %c0_2 = arith.constant 0 : index
    %3 = vector.load %arg1[%c256, %c0_2] : memref<288x16xf32, #tpu.memory_space<vmem>>, vector<32x16xf32>
    %4 = arith.truncf %2 : vector<256x16xf32> to vector<256x16xbf16>
    %c0_3 = arith.constant 0 : index
    %c0_4 = arith.constant 0 : index
    %5 = vector.load %arg2[%c0_3, %c0_4] : memref<224x128xbf16, #tpu.memory_space<vmem>>, vector<16x16xbf16>
    %cst = arith.constant dense<0.000000e+00> : vector<256x16xf32>
    %6 = tpu.matmul %4, %5, %cst {dimension_numbers = #tpu.dot_dimension_numbers<[1], [0], [0], [1], [0, 0, 1, 1], [], []>} : vector<256x16xbf16>, vector<16x16xbf16>, vector<256x16xf32> -> vector<256x16xf32>
    %7 = vector.extract_strided_slice %1 {offsets = [0, 0], sizes = [1, 16], strides = [1, 1]} : vector<16x128xf32> to vector<1x16xf32>
    %8 = vector.broadcast %7 : vector<1x16xf32> to vector<256x16xf32>
    %9 = arith.addf %6, %8 : vector<256x16xf32>
    %cst_5 = arith.constant 0.000000e+00 : f32
    %10 = vector.broadcast %cst_5 : f32 to vector<256x16xf32>
    %11 = arith.maximumf %9, %10 : vector<256x16xf32>
    %12 = arith.truncf %11 : vector<256x16xf32> to vector<256x16xbf16>
    %c16 = arith.constant 16 : index
    %c0_6 = arith.constant 0 : index
    %13 = vector.load %arg2[%c16, %c0_6] : memref<224x128xbf16, #tpu.memory_space<vmem>>, vector<16x16xbf16>
    %cst_7 = arith.constant dense<0.000000e+00> : vector<256x16xf32>
    %14 = tpu.matmul %12, %13, %cst_7 {dimension_numbers = #tpu.dot_dimension_numbers<[1], [0], [0], [1], [0, 0, 1, 1], [], []>} : vector<256x16xbf16>, vector<16x16xbf16>, vector<256x16xf32> -> vector<256x16xf32>
    %15 = vector.extract_strided_slice %1 {offsets = [1, 0], sizes = [1, 16], strides = [1, 1]} : vector<16x128xf32> to vector<1x16xf32>
    %16 = vector.broadcast %15 : vector<1x16xf32> to vector<256x16xf32>
    %17 = arith.addf %14, %16 : vector<256x16xf32>
    %cst_8 = arith.constant 0.000000e+00 : f32
    %18 = vector.broadcast %cst_8 : f32 to vector<256x16xf32>
    %19 = arith.maximumf %17, %18 : vector<256x16xf32>
    %20 = arith.truncf %19 : vector<256x16xf32> to vector<256x16xbf16>
    %c32 = arith.constant 32 : index
    %c0_9 = arith.constant 0 : index
    %21 = vector.load %arg2[%c32, %c0_9] : memref<224x128xbf16, #tpu.memory_space<vmem>>, vector<16x32xbf16>
    %cst_10 = arith.constant dense<0.000000e+00> : vector<256x32xf32>
    %22 = tpu.matmul %20, %21, %cst_10 {dimension_numbers = #tpu.dot_dimension_numbers<[1], [0], [0], [1], [0, 0, 1, 1], [], []>} : vector<256x16xbf16>, vector<16x32xbf16>, vector<256x32xf32> -> vector<256x32xf32>
    %23 = vector.extract_strided_slice %1 {offsets = [2, 0], sizes = [1, 32], strides = [1, 1]} : vector<16x128xf32> to vector<1x32xf32>
    %24 = vector.broadcast %23 : vector<1x32xf32> to vector<256x32xf32>
    %25 = arith.addf %22, %24 : vector<256x32xf32>
    %cst_11 = arith.constant 0.000000e+00 : f32
    %26 = vector.broadcast %cst_11 : f32 to vector<256x32xf32>
    %27 = arith.maximumf %25, %26 : vector<256x32xf32>
    %28 = vector.extract_strided_slice %27 {offsets = [0, 0], sizes = [32, 32], strides = [1, 1]} : vector<256x32xf32> to vector<32x32xf32>
    %29 = vector.extract_strided_slice %27 {offsets = [32, 0], sizes = [32, 32], strides = [1, 1]} : vector<256x32xf32> to vector<32x32xf32>
    %30 = vector.extract_strided_slice %27 {offsets = [64, 0], sizes = [32, 32], strides = [1, 1]} : vector<256x32xf32> to vector<32x32xf32>
    %31 = vector.extract_strided_slice %27 {offsets = [96, 0], sizes = [32, 32], strides = [1, 1]} : vector<256x32xf32> to vector<32x32xf32>
    %32 = vector.extract_strided_slice %27 {offsets = [128, 0], sizes = [32, 32], strides = [1, 1]} : vector<256x32xf32> to vector<32x32xf32>
    %33 = vector.extract_strided_slice %27 {offsets = [160, 0], sizes = [32, 32], strides = [1, 1]} : vector<256x32xf32> to vector<32x32xf32>
    %34 = vector.extract_strided_slice %27 {offsets = [192, 0], sizes = [32, 32], strides = [1, 1]} : vector<256x32xf32> to vector<32x32xf32>
    %35 = vector.extract_strided_slice %27 {offsets = [224, 0], sizes = [32, 32], strides = [1, 1]} : vector<256x32xf32> to vector<32x32xf32>
    %36 = arith.maximumf %28, %29 : vector<32x32xf32>
    %37 = arith.maximumf %30, %31 : vector<32x32xf32>
    %38 = arith.maximumf %32, %33 : vector<32x32xf32>
    %39 = arith.maximumf %34, %35 : vector<32x32xf32>
    %40 = arith.maximumf %36, %37 : vector<32x32xf32>
    %41 = arith.maximumf %38, %39 : vector<32x32xf32>
    %42 = arith.maximumf %40, %41 : vector<32x32xf32>
    %43 = arith.truncf %3 : vector<32x16xf32> to vector<32x16xbf16>
    %c48 = arith.constant 48 : index
    %c0_12 = arith.constant 0 : index
    %44 = vector.load %arg2[%c48, %c0_12] : memref<224x128xbf16, #tpu.memory_space<vmem>>, vector<16x32xbf16>
    %cst_13 = arith.constant dense<0.000000e+00> : vector<32x32xf32>
    %45 = tpu.matmul %43, %44, %cst_13 {dimension_numbers = #tpu.dot_dimension_numbers<[1], [0], [0], [1], [0, 0, 1, 1], [], []>} : vector<32x16xbf16>, vector<16x32xbf16>, vector<32x32xf32> -> vector<32x32xf32>
    %46 = arith.truncf %42 : vector<32x32xf32> to vector<32x32xbf16>
    %c64 = arith.constant 64 : index
    %c0_14 = arith.constant 0 : index
    %47 = vector.load %arg2[%c64, %c0_14] : memref<224x128xbf16, #tpu.memory_space<vmem>>, vector<32x32xbf16>
    %cst_15 = arith.constant dense<0.000000e+00> : vector<32x32xf32>
    %48 = tpu.matmul %46, %47, %cst_15 {dimension_numbers = #tpu.dot_dimension_numbers<[1], [0], [0], [1], [0, 0, 1, 1], [], []>} : vector<32x32xbf16>, vector<32x32xbf16>, vector<32x32xf32> -> vector<32x32xf32>
    %49 = arith.addf %45, %48 : vector<32x32xf32>
    %50 = vector.extract_strided_slice %1 {offsets = [3, 0], sizes = [1, 32], strides = [1, 1]} : vector<16x128xf32> to vector<1x32xf32>
    %51 = vector.broadcast %50 : vector<1x32xf32> to vector<32x32xf32>
    %52 = arith.addf %49, %51 : vector<32x32xf32>
    %cst_16 = arith.constant 0.000000e+00 : f32
    %53 = vector.broadcast %cst_16 : f32 to vector<32x32xf32>
    %54 = arith.maximumf %52, %53 : vector<32x32xf32>
    %55 = arith.truncf %54 : vector<32x32xf32> to vector<32x32xbf16>
    %c96 = arith.constant 96 : index
    %c0_17 = arith.constant 0 : index
    %56 = vector.load %arg2[%c96, %c0_17] : memref<224x128xbf16, #tpu.memory_space<vmem>>, vector<32x32xbf16>
    %cst_18 = arith.constant dense<0.000000e+00> : vector<32x32xf32>
    %57 = tpu.matmul %55, %56, %cst_18 {dimension_numbers = #tpu.dot_dimension_numbers<[1], [0], [0], [1], [0, 0, 1, 1], [], []>} : vector<32x32xbf16>, vector<32x32xbf16>, vector<32x32xf32> -> vector<32x32xf32>
    %58 = vector.extract_strided_slice %1 {offsets = [4, 0], sizes = [1, 32], strides = [1, 1]} : vector<16x128xf32> to vector<1x32xf32>
    %59 = vector.broadcast %58 : vector<1x32xf32> to vector<32x32xf32>
    %60 = arith.addf %57, %59 : vector<32x32xf32>
    %cst_19 = arith.constant 0.000000e+00 : f32
    %61 = vector.broadcast %cst_19 : f32 to vector<32x32xf32>
    %62 = arith.maximumf %60, %61 : vector<32x32xf32>
    %63 = arith.truncf %62 : vector<32x32xf32> to vector<32x32xbf16>
    %c128 = arith.constant 128 : index
    %c0_20 = arith.constant 0 : index
    %64 = vector.load %arg2[%c128, %c0_20] : memref<224x128xbf16, #tpu.memory_space<vmem>>, vector<32x32xbf16>
    %cst_21 = arith.constant dense<0.000000e+00> : vector<32x32xf32>
    %65 = tpu.matmul %63, %64, %cst_21 {dimension_numbers = #tpu.dot_dimension_numbers<[1], [0], [0], [1], [0, 0, 1, 1], [], []>} : vector<32x32xbf16>, vector<32x32xbf16>, vector<32x32xf32> -> vector<32x32xf32>
    %66 = vector.extract_strided_slice %1 {offsets = [5, 0], sizes = [1, 32], strides = [1, 1]} : vector<16x128xf32> to vector<1x32xf32>
    %67 = vector.broadcast %66 : vector<1x32xf32> to vector<32x32xf32>
    %68 = arith.addf %65, %67 : vector<32x32xf32>
    %cst_22 = arith.constant 0.000000e+00 : f32
    %69 = vector.broadcast %cst_22 : f32 to vector<32x32xf32>
    %70 = arith.maximumf %68, %69 : vector<32x32xf32>
    %71 = vector.extract_strided_slice %70 {offsets = [0, 0], sizes = [16, 32], strides = [1, 1]} : vector<32x32xf32> to vector<16x32xf32>
    %cst_23 = arith.constant dense<0xFF800000> : vector<32xf32>
    %72 = vector.multi_reduction <maximumf>, %71, %cst_23 [0] : vector<16x32xf32> to vector<32xf32>
    %73 = vector.shape_cast %72 : vector<32xf32> to vector<1x32xf32>
    %74 = vector.extract_strided_slice %70 {offsets = [16, 0], sizes = [16, 32], strides = [1, 1]} : vector<32x32xf32> to vector<16x32xf32>
    %cst_24 = arith.constant dense<0xFF800000> : vector<32xf32>
    %75 = vector.multi_reduction <maximumf>, %74, %cst_24 [0] : vector<16x32xf32> to vector<32xf32>
    %76 = vector.shape_cast %75 : vector<32xf32> to vector<1x32xf32>
    %77 = tpu.iota {dimensions = array<i32: 0>} : vector<2x32xi32>
    %78 = vector.shape_cast %73 : vector<1x32xf32> to vector<1x32xf32>
    %79 = vector.broadcast %78 : vector<1x32xf32> to vector<2x32xf32>
    %c1_i32 = arith.constant 1 : i32
    %80 = vector.broadcast %c1_i32 : i32 to vector<2x32xi32>
    %81 = arith.cmpi eq, %77, %80 : vector<2x32xi32>
    %82 = vector.shape_cast %76 : vector<1x32xf32> to vector<1x32xf32>
    %83 = vector.broadcast %82 : vector<1x32xf32> to vector<2x32xf32>
    %84 = arith.select %81, %83, %79 : vector<2x32xi1>, vector<2x32xf32>
    %85 = arith.truncf %84 : vector<2x32xf32> to vector<2x32xbf16>
    %c160 = arith.constant 160 : index
    %c0_25 = arith.constant 0 : index
    %86 = vector.load %arg2[%c160, %c0_25] : memref<224x128xbf16, #tpu.memory_space<vmem>>, vector<32x16xbf16>
    %cst_26 = arith.constant dense<0.000000e+00> : vector<2x16xf32>
    %87 = tpu.matmul %85, %86, %cst_26 {dimension_numbers = #tpu.dot_dimension_numbers<[1], [0], [0], [1], [0, 0, 1, 1], [], []>} : vector<2x32xbf16>, vector<32x16xbf16>, vector<2x16xf32> -> vector<2x16xf32>
    %88 = vector.extract_strided_slice %1 {offsets = [6, 0], sizes = [1, 16], strides = [1, 1]} : vector<16x128xf32> to vector<1x16xf32>
    %89 = vector.broadcast %88 : vector<1x16xf32> to vector<2x16xf32>
    %90 = arith.addf %87, %89 : vector<2x16xf32>
    %cst_27 = arith.constant 0.000000e+00 : f32
    %91 = vector.broadcast %cst_27 : f32 to vector<2x16xf32>
    %92 = arith.maximumf %90, %91 : vector<2x16xf32>
    %cst_28 = arith.constant dense<0.000000e+00> : vector<2xf32>
    %93 = vector.multi_reduction <add>, %92, %cst_28 [1] : vector<2x16xf32> to vector<2xf32>
    %94 = vector.shape_cast %93 : vector<2xf32> to vector<2x1xf32>
    %cst_29 = arith.constant 1.600000e+01 : f32
    %95 = vector.broadcast %cst_29 : f32 to vector<2x1xf32>
    %96 = arith.divf %94, %95 : vector<2x1xf32>
    %97 = vector.broadcast %96 : vector<2x1xf32> to vector<2x16xf32>
    %98 = arith.subf %92, %97 : vector<2x16xf32>
    %99 = arith.mulf %98, %98 : vector<2x16xf32>
    %cst_30 = arith.constant dense<0.000000e+00> : vector<2xf32>
    %100 = vector.multi_reduction <add>, %99, %cst_30 [1] : vector<2x16xf32> to vector<2xf32>
    %101 = vector.shape_cast %100 : vector<2xf32> to vector<2x1xf32>
    %cst_31 = arith.constant 1.600000e+01 : f32
    %102 = vector.broadcast %cst_31 : f32 to vector<2x1xf32>
    %103 = arith.divf %101, %102 : vector<2x1xf32>
    %104 = vector.broadcast %96 : vector<2x1xf32> to vector<2x16xf32>
    %105 = arith.subf %92, %104 : vector<2x16xf32>
    %cst_32 = arith.constant 9.99999996E-13 : f32
    %106 = vector.broadcast %cst_32 : f32 to vector<2x1xf32>
    %107 = arith.addf %103, %106 : vector<2x1xf32>
    %108 = math.rsqrt %107 : vector<2x1xf32>
    %109 = vector.broadcast %108 : vector<2x1xf32> to vector<2x16xf32>
    %110 = arith.mulf %105, %109 : vector<2x16xf32>
    %111 = arith.truncf %110 : vector<2x16xf32> to vector<2x16xbf16>
    %c192 = arith.constant 192 : index
    %c0_33 = arith.constant 0 : index
    %112 = vector.load %arg2[%c192, %c0_33] : memref<224x128xbf16, #tpu.memory_space<vmem>>, vector<16x128xbf16>
    %cst_34 = arith.constant dense<0.000000e+00> : vector<2x128xf32>
    %113 = tpu.matmul %111, %112, %cst_34 {dimension_numbers = #tpu.dot_dimension_numbers<[1], [0], [0], [1], [0, 0, 1, 1], [], []>} : vector<2x16xbf16>, vector<16x128xbf16>, vector<2x128xf32> -> vector<2x128xf32>
    %114 = vector.extract_strided_slice %1 {offsets = [7, 0], sizes = [1, 128], strides = [1, 1]} : vector<16x128xf32> to vector<1x128xf32>
    %115 = vector.broadcast %114 : vector<1x128xf32> to vector<2x128xf32>
    %116 = arith.addf %113, %115 : vector<2x128xf32>
    %c0_35 = arith.constant 0 : index
    %c0_36 = arith.constant 0 : index
    %117 = vector.load %arg3[%c0_35, %c0_36] : memref<2x128xf32, #tpu.memory_space<vmem>>, vector<2x128xf32>
    tpu.vector_store %arg3[%c0_35, %c0_36], %116 {strides = array<i32>} : memref<2x128xf32, #tpu.memory_space<vmem>>, vector<2x128xf32>,
    return
  }
  func.func @transform_0(%arg0: i32) -> (i32, i32) {
    %c0_i32 = arith.constant 0 : i32
    %c0_i32_0 = arith.constant 0 : i32
    %c0_i32_1 = arith.constant 0 : i32
    return %c0_i32, %c0_i32_0 : i32, i32
  }
  func.func @transform_1(%arg0: i32) -> (i32, i32) {
    %c0_i32 = arith.constant 0 : i32
    %c0_i32_0 = arith.constant 0 : i32
    %c0_i32_1 = arith.constant 0 : i32
    return %c0_i32, %c0_i32_0 : i32, i32
  }
  func.func @transform_2(%arg0: i32) -> (i32, i32) {
    %c0_i32 = arith.constant 0 : i32
    %c0_i32_0 = arith.constant 0 : i32
    %c0_i32_1 = arith.constant 0 : i32
    return %c0_i32, %c0_i32_0 : i32, i32
  }
}

</mosaic_0001>

<llo_original>
// kernel: custom-call.8
$region0: #{custom-call.8}
  %s0 = inlined_call_operand.vmem [shape: f32[2,64], index: 0, kind: output, shape index: {}]

// kernel: _lambda_.1
$region0: #{_lambda_.1}
  #allocation0 [shape = 'u32[]', space=smem, size = 0x4, offset = 0x4, fixed_abs, tag = 'smem constant byte address 0x4 - core index']
  #allocation1 [shape = 'u32[144,128]{1,0:T(1,128)}', space=vmem, size = 0x12000, scoped, tag = 'internal scratch']
  %s0 = inlined_call_operand.vmem [shape: f32[288,16], index: 0, kind: input, shape index: {}]
  %s1 = inlined_call_operand.vmem [shape: bf16[224,128], index: 1, kind: input, shape index: {}]
  %s2 = inlined_call_operand.hbm [shape: f32[2,128], index: 2, kind: output, shape index: {}]
  %s3 = sld [smem:[#allocation0]]
  $region18: #{_lambda_.1} parent=0
    _
  %s5 = ssub.s32 1, %s3
  %s6 = scalar_select 0, %s5, %s3
  $region1: #{_lambda_.1} parent=0
    #allocation2 [shape = 'u8[1024]{0}', space=vmem, size = 0x400, scoped, tag = 'output window, operand 0, single buffered']
    #allocation3 [shape = 's32[1]{0}', space=sflag, size = 0x4, scoped, tag = 'scoped memory for _lambda_.1']
    %7 = vsyncpa [#allocation3], 0
    // Predicated region
    $region2: #{_lambda_.1} parent=1 // pred_check
      _
    $region3: #{_lambda_.1} parent=1 // pred_check_branch
      %9 = sbr.rel (0) target = $region5
    $region4: #{_lambda_.1} parent=1 // pred_region
      _
    $region5: #{_lambda_.1} parent=1 // pred_fallthru
      _
    // Predicated region
    $region6: #{_lambda_.1} parent=1 // pred_check
      _
    $region7: #{_lambda_.1} parent=1 // pred_check_branch
      %11 = sbr.rel (0) target = $region9
    $region8: #{_lambda_.1} parent=1 // pred_region
      _
    $region9: #{_lambda_.1} parent=1 // pred_fallthru
      _
    %v13 = vld [vmem:[%s1 + $0x68] sm:$0xf]
    %v14 = vunpack.c.l.bf16 %v13
    %v15 = vld [vmem:[%s0] sm:$0xff]
    %v16 = vld [vmem:[%s0 + $0x8] sm:$0xff]
    %v17 = vld [vmem:[%s0 + $0x10] sm:$0xff]
    %v18 = vld [vmem:[%s0 + $0x18] sm:$0xff]
    %v19 = vld [vmem:[%s0 + $0x20] sm:$0xff]
    %v20 = vld [vmem:[%s0 + $0x28] sm:$0xff]
    %v21 = vld [vmem:[%s0 + $0x30] sm:$0xff]
    %v22 = vld [vmem:[%s0 + $0x38] sm:$0xff]
    %v23 = vld [vmem:[%s0 + $0x40] sm:$0xff]
    %v24 = vld [vmem:[%s0 + $0x48] sm:$0xff]
    %v25 = vld [vmem:[%s0 + $0x50] sm:$0xff]
    %v26 = vld [vmem:[%s0 + $0x58] sm:$0xff]
    %v27 = vld [vmem:[%s0 + $0x60] sm:$0xff]
    %v28 = vld [vmem:[%s0 + $0x68] sm:$0xff]
    %v29 = vld [vmem:[%s0 + $0x70] sm:$0xff]
    %v30 = vld [vmem:[%s0 + $0x78] sm:$0xff]
    %v31 = vld [vmem:[%s0 + $0x80] sm:$0xff]
    %v32 = vld [vmem:[%s0 + $0x88] sm:$0xff]
    %v33 = vld [vmem:[%s0 + $0x90] sm:$0xff]
    %v34 = vld [vmem:[%s0 + $0x98] sm:$0xff]
    %v35 = vld [vmem:[%s0 + $0xa0] sm:$0xff]
    %v36 = vld [vmem:[%s0 + $0xa8] sm:$0xff]
    %v37 = vld [vmem:[%s0 + $0xb0] sm:$0xff]
    %v38 = vld [vmem:[%s0 + $0xb8] sm:$0xff]
    %v39 = vld [vmem:[%s0 + $0xc0] sm:$0xff]
    %v40 = vld [vmem:[%s0 + $0xc8] sm:$0xff]
    %v41 = vld [vmem:[%s0 + $0xd0] sm:$0xff]
    %v42 = vld [vmem:[%s0 + $0xd8] sm:$0xff]
    %v43 = vld [vmem:[%s0 + $0xe0] sm:$0xff]
    %v44 = vld [vmem:[%s0 + $0xe8] sm:$0xff]
    %v45 = vld [vmem:[%s0 + $0xf0] sm:$0xff]
    %v46 = vld [vmem:[%s0 + $0xf8] sm:$0xff]
    %v47 = vld [vmem:[%s0 + $0x100] sm:$0xff]
    %v48 = vld [vmem:[%s0 + $0x108] sm:$0xff]
    %v49 = vld [vmem:[%s0 + $0x110] sm:$0xff]
    %v50 = vld [vmem:[%s0 + $0x118] sm:$0xff]
    %v51 = vpack.c.bf16 %v16, %v15
    %v52 = vpack.c.bf16 %v18, %v17
    %v53 = vpack.c.bf16 %v20, %v19
    %v54 = vpack.c.bf16 %v22, %v21
    %v55 = vpack.c.bf16 %v24, %v23
    %v56 = vpack.c.bf16 %v26, %v25
    %v57 = vpack.c.bf16 %v28, %v27
    %v58 = vpack.c.bf16 %v30, %v29
    %v59 = vpack.c.bf16 %v32, %v31
    %v60 = vpack.c.bf16 %v34, %v33
    %v61 = vpack.c.bf16 %v36, %v35
    %v62 = vpack.c.bf16 %v38, %v37
    %v63 = vpack.c.bf16 %v40, %v39
    %v64 = vpack.c.bf16 %v42, %v41
    %v65 = vpack.c.bf16 %v44, %v43
    %v66 = vpack.c.bf16 %v46, %v45
    %v67 = vld [vmem:[%s1] sm:$0xf]
    %v68 = vld [vmem:[%s1 + $0x4] sm:$0xf]
    %v69 = vlaneseq
    %v70 = vshrl.u32 %v69, 7
    %v71 = vsub.s32 0, %v70
    %v72 = vrot.slane %v14, %v71
    %v75 = vunpack.c.l.b16 %v67
    %v76 = vunpack.c.l.b16 %v68
    %v77 = vpack.c.b16 %v76, %v75
    %vm79 = vcmask 130048
    %v81 = vsel %vm79, %v51, 0
    %v84 = vsel %vm79, %v52, 0
    %v87 = vsel %vm79, %v53, 0
    %v90 = vsel %vm79, %v54, 0
    %v93 = vsel %vm79, %v55, 0
    %v96 = vsel %vm79, %v56, 0
    %v99 = vsel %vm79, %v57, 0
    %v102 = vsel %vm79, %v58, 0
    %v105 = vsel %vm79, %v59, 0
    %v108 = vsel %vm79, %v60, 0
    %v111 = vsel %vm79, %v61, 0
    %v114 = vsel %vm79, %v62, 0
    %v117 = vsel %vm79, %v63, 0
    %v120 = vsel %vm79, %v64, 0
    %v123 = vsel %vm79, %v65, 0
    %v126 = vsel %vm79, %v66, 0
    %128 = vmatprep.subr.bf16.mxu0 0
    %129 = vmatpush1.bf16.msra.mxu0 %v77
    %130 = vmatprep.subr.bf16.mxu0 0
    %131 = vmatpush1.bf16.msra.mxu0 0
    %132 = vmatprep.subr.bf16.mxu0 0
    %133 = vmatpush1.bf16.msra.mxu0 0
    %134 = vmatprep.subr.bf16.mxu0 0
    %135 = vmatpush1.bf16.msra.mxu0 0
    %136 = vmatprep.subr.bf16.mxu0 0
    %137 = vmatpush1.bf16.msra.mxu0 0
    %138 = vmatprep.subr.bf16.mxu0 0
    %139 = vmatpush1.bf16.msra.mxu0 0
    %140 = vmatprep.subr.bf16.mxu0 0
    %141 = vmatpush1.bf16.msra.mxu0 0
    %142 = vmatprep.subr.bf16.mxu0 0
    %143 = vmatpush1.bf16.msra.mxu0 0
    %144 = vmatprep.subr.bf16.mxu0 0
    %145 = vmatpush1.bf16.msra.mxu0 0
    %146 = vmatprep.subr.bf16.mxu0 0
    %147 = vmatpush1.bf16.msra.mxu0 0
    %148 = vmatprep.subr.bf16.mxu0 0
    %149 = vmatpush1.bf16.msra.mxu0 0
    %150 = vmatprep.subr.bf16.mxu0 0
    %151 = vmatpush1.bf16.msra.mxu0 0
    %152 = vmatprep.subr.bf16.mxu0 0
    %153 = vmatpush1.bf16.msra.mxu0 0
    %154 = vmatprep.subr.bf16.mxu0 0
    %155 = vmatpush1.bf16.msra.mxu0 0
    %156 = vmatprep.subr.bf16.mxu0 0
    %157 = vmatpush1.bf16.msra.mxu0 0
    %158 = vmatprep.subr.bf16.mxu0 0
    %159 = vmatpush1.bf16.msra.mxu0 0
    %160 = vmatprep.mubr.bf16.mxu0 0
    %161 = vmatmul.mubr.bf16.gmra.mrb[0].mxu0 %v81
    %v162 = vpop.f32.mrb[0].mxu0
    %v163 = vadd.f32 %v72, %v162
    %v164 = vpop.f32.mrb[0].mxu0
    %v165 = vpop.f32.mrb[0].mxu0
    %v166 = vadd.f32 %v72, %v165
    %v167 = vpop.f32.mrb[0].mxu0
    %168 = vmatprep.mubr.bf16.mxu0 0
    %169 = vmatmul.mubr.bf16.gmra.mrb[0].mxu0 %v84
    %v170 = vpop.f32.mrb[0].mxu0
    %v171 = vadd.f32 %v72, %v170
    %v172 = vpop.f32.mrb[0].mxu0
    %v173 = vpop.f32.mrb[0].mxu0
    %v174 = vadd.f32 %v72, %v173
    %v175 = vpop.f32.mrb[0].mxu0
    %176 = vmatprep.mubr.bf16.mxu0 0
    %177 = vmatmul.mubr.bf16.gmra.mrb[0].mxu0 %v87
    %v178 = vpop.f32.mrb[0].mxu0
    %v179 = vadd.f32 %v72, %v178
    %v180 = vpop.f32.mrb[0].mxu0
    %v181 = vpop.f32.mrb[0].mxu0
    %v182 = vadd.f32 %v72, %v181
    %v183 = vpop.f32.mrb[0].mxu0
    %184 = vmatprep.mubr.bf16.mxu0 0
    %185 = vmatmul.mubr.bf16.gmra.mrb[0].mxu0 %v90
    %v186 = vpop.f32.mrb[0].mxu0
    %v187 = vadd.f32 %v72, %v186
    %v188 = vpop.f32.mrb[0].mxu0
    %v189 = vpop.f32.mrb[0].mxu0
    %v190 = vadd.f32 %v72, %v189
    %v191 = vpop.f32.mrb[0].mxu0
    %192 = vmatprep.mubr.bf16.mxu0 0
    %193 = vmatmul.mubr.bf16.gmra.mrb[0].mxu0 %v93
    %v194 = vpop.f32.mrb[0].mxu0
    %v195 = vadd.f32 %v72, %v194
    %v196 = vpop.f32.mrb[0].mxu0
    %v197 = vpop.f32.mrb[0].mxu0
    %v198 = vadd.f32 %v72, %v197
    %v199 = vpop.f32.mrb[0].mxu0
    %200 = vmatprep.mubr.bf16.mxu0 0
    %201 = vmatmul.mubr.bf16.gmra.mrb[0].mxu0 %v96
    %v202 = vpop.f32.mrb[0].mxu0
    %v203 = vadd.f32 %v72, %v202
    %v204 = vpop.f32.mrb[0].mxu0
    %v205 = vpop.f32.mrb[0].mxu0
    %v206 = vadd.f32 %v72, %v205
    %v207 = vpop.f32.mrb[0].mxu0
    %208 = vmatprep.mubr.bf16.mxu0 0
    %209 = vmatmul.mubr.bf16.gmra.mrb[0].mxu0 %v99
    %v210 = vpop.f32.mrb[0].mxu0
    %v211 = vadd.f32 %v72, %v210
    %v212 = vpop.f32.mrb[0].mxu0
    %v213 = vpop.f32.mrb[0].mxu0
    %v214 = vadd.f32 %v72, %v213
    %v215 = vpop.f32.mrb[0].mxu0
    %216 = vmatprep.mubr.bf16.mxu0 0
    %217 = vmatmul.mubr.bf16.gmra.mrb[0].mxu0 %v102
    %v218 = vpop.f32.mrb[0].mxu0
    %v219 = vadd.f32 %v72, %v218
    %v220 = vpop.f32.mrb[0].mxu0
    %v221 = vpop.f32.mrb[0].mxu0
    %v222 = vadd.f32 %v72, %v221
    %v223 = vpop.f32.mrb[0].mxu0
    %224 = vmatprep.mubr.bf16.mxu0 0
    %225 = vmatmul.mubr.bf16.gmra.mrb[0].mxu0 %v105
    %v226 = vpop.f32.mrb[0].mxu0
    %v227 = vadd.f32 %v72, %v226
    %v228 = vpop.f32.mrb[0].mxu0
    %v229 = vpop.f32.mrb[0].mxu0
    %v230 = vadd.f32 %v72, %v229
    %v231 = vpop.f32.mrb[0].mxu0
    %232 = vmatprep.mubr.bf16.mxu0 0
    %233 = vmatmul.mubr.bf16.gmra.mrb[0].mxu0 %v108
    %v234 = vpop.f32.mrb[0].mxu0
    %v235 = vadd.f32 %v72, %v234
    %v236 = vpop.f32.mrb[0].mxu0
    %v237 = vpop.f32.mrb[0].mxu0
    %v238 = vadd.f32 %v72, %v237
    %v239 = vpop.f32.mrb[0].mxu0
    %240 = vmatprep.mubr.bf16.mxu0 0
    %241 = vmatmul.mubr.bf16.gmra.mrb[0].mxu0 %v111
    %v242 = vpop.f32.mrb[0].mxu0
    %v243 = vadd.f32 %v72, %v242
    %v244 = vpop.f32.mrb[0].mxu0
    %v245 = vpop.f32.mrb[0].mxu0
    %v246 = vadd.f32 %v72, %v245
    %v247 = vpop.f32.mrb[0].mxu0
    %248 = vmatprep.mubr.bf16.mxu0 0
    %249 = vmatmul.mubr.bf16.gmra.mrb[0].mxu0 %v114
    %v250 = vpop.f32.mrb[0].mxu0
    %v251 = vadd.f32 %v72, %v250
    %v252 = vpop.f32.mrb[0].mxu0
    %v253 = vpop.f32.mrb[0].mxu0
    %v254 = vadd.f32 %v72, %v253
    %v255 = vpop.f32.mrb[0].mxu0
    %256 = vmatprep.mubr.bf16.mxu0 0
    %257 = vmatmul.mubr.bf16.gmra.mrb[0].mxu0 %v117
    %v258 = vpop.f32.mrb[0].mxu0
    %v259 = vadd.f32 %v72, %v258
    %v260 = vpop.f32.mrb[0].mxu0
    %v261 = vpop.f32.mrb[0].mxu0
    %v262 = vadd.f32 %v72, %v261
    %v263 = vpop.f32.mrb[0].mxu0
    %264 = vmatprep.mubr.bf16.mxu0 0
    %265 = vmatmul.mubr.bf16.gmra.mrb[0].mxu0 %v120
    %v266 = vpop.f32.mrb[0].mxu0
    %v267 = vadd.f32 %v72, %v266
    %v268 = vpop.f32.mrb[0].mxu0
    %v269 = vpop.f32.mrb[0].mxu0
    %v270 = vadd.f32 %v72, %v269
    %v271 = vpop.f32.mrb[0].mxu0
    %272 = vmatprep.mubr.bf16.mxu0 0
    %273 = vmatmul.mubr.bf16.gmra.mrb[0].mxu0 %v123
    %v274 = vpop.f32.mrb[0].mxu0
    %v275 = vadd.f32 %v72, %v274
    %v276 = vpop.f32.mrb[0].mxu0
    %v277 = vpop.f32.mrb[0].mxu0
    %v278 = vadd.f32 %v72, %v277
    %v279 = vpop.f32.mrb[0].mxu0
    %280 = vmatprep.mubr.bf16.mxu0 0
    %281 = vmatmul.mubr.bf16.gmra.mrb[0].mxu0 %v126
    %v282 = vpop.f32.mrb[0].mxu0
    %v283 = vadd.f32 %v72, %v282
    %v284 = vpop.f32.mrb[0].mxu0
    %v285 = vpop.f32.mrb[0].mxu0
    %v286 = vadd.f32 %v72, %v285
    %v287 = vpop.f32.mrb[0].mxu0
    %288 = vdwg.mxu0
    %v289 = vmax.f32 %v163, 0.0
    %v290 = vmax.f32 %v166, 0.0
    %v291 = vmax.f32 %v171, 0.0
    %v292 = vmax.f32 %v174, 0.0
    %v293 = vmax.f32 %v179, 0.0
    %v294 = vmax.f32 %v182, 0.0
    %v295 = vmax.f32 %v187, 0.0
    %v296 = vmax.f32 %v190, 0.0
    %v297 = vmax.f32 %v195, 0.0
    %v298 = vmax.f32 %v198, 0.0
    %v299 = vmax.f32 %v203, 0.0
    %v300 = vmax.f32 %v206, 0.0
    %v301 = vmax.f32 %v211, 0.0
    %v302 = vmax.f32 %v214, 0.0
    %v303 = vmax.f32 %v219, 0.0
    %v304 = vmax.f32 %v222, 0.0
    %v305 = vmax.f32 %v227, 0.0
    %v306 = vmax.f32 %v230, 0.0
    %v307 = vmax.f32 %v235, 0.0
    %v308 = vmax.f32 %v238, 0.0
    %v309 = vmax.f32 %v243, 0.0
    %v310 = vmax.f32 %v246, 0.0
    %v311 = vmax.f32 %v251, 0.0
    %v312 = vmax.f32 %v254, 0.0
    %v313 = vmax.f32 %v259, 0.0
    %v314 = vmax.f32 %v262, 0.0
    %v315 = vmax.f32 %v267, 0.0
    %v316 = vmax.f32 %v270, 0.0
    %v317 = vmax.f32 %v275, 0.0
    %v318 = vmax.f32 %v278, 0.0
    %v319 = vmax.f32 %v283, 0.0
    %v320 = vmax.f32 %v286, 0.0
    %v321 = vpack.c.bf16 %v290, %v289
    %v322 = vpack.c.bf16 %v292, %v291
    %v323 = vpack.c.bf16 %v294, %v293
    %v324 = vpack.c.bf16 %v296, %v295
    %v325 = vpack.c.bf16 %v298, %v297
    %v326 = vpack.c.bf16 %v300, %v299
    %v327 = vpack.c.bf16 %v302, %v301
    %v328 = vpack.c.bf16 %v304, %v303
    %v329 = vpack.c.bf16 %v306, %v305
    %v330 = vpack.c.bf16 %v308, %v307
    %v331 = vpack.c.bf16 %v310, %v309
    %v332 = vpack.c.bf16 %v312, %v311
    %v333 = vpack.c.bf16 %v314, %v313
    %v334 = vpack.c.bf16 %v316, %v315
    %v335 = vpack.c.bf16 %v318, %v317
    %v336 = vpack.c.bf16 %v320, %v319
    %v337 = vld [vmem:[%s1 + $0x8] sm:$0xf]
    %v338 = vld [vmem:[%s1 + $0xc] sm:$0xf]
    %v339 = vlaneseq
    %v340 = vshrl.u32 %v339, 7
    %v341 = vsub.s32 1, %v340
    %v342 = vrot.slane %v14, %v341
    %v345 = vunpack.c.l.b16 %v337
    %v346 = vunpack.c.l.b16 %v338
    %v347 = vpack.c.b16 %v346, %v345
    %v350 = vsel %vm79, %v321, 0
    %v353 = vsel %vm79, %v322, 0
    %v356 = vsel %vm79, %v323, 0
    %v359 = vsel %vm79, %v324, 0
    %v362 = vsel %vm79, %v325, 0
    %v365 = vsel %vm79, %v326, 0
    %v368 = vsel %vm79, %v327, 0
    %v371 = vsel %vm79, %v328, 0
    %v374 = vsel %vm79, %v329, 0
    %v377 = vsel %vm79, %v330, 0
    %v380 = vsel %vm79, %v331, 0
    %v383 = vsel %vm79, %v332, 0
    %v386 = vsel %vm79, %v333, 0
    %v389 = vsel %vm79, %v334, 0
    %v392 = vsel %vm79, %v335, 0
    %v395 = vsel %vm79, %v336, 0
    %397 = vmatprep.subr.bf16.mxu0 0
    %398 = vmatpush1.bf16.msra.mxu0 %v347
    %399 = vmatprep.subr.bf16.mxu0 0
    %400 = vmatpush1.bf16.msra.mxu0 0
    %401 = vmatprep.subr.bf16.mxu0 0
    %402 = vmatpush1.bf16.msra.mxu0 0
    %403 = vmatprep.subr.bf16.mxu0 0
    %404 = vmatpush1.bf16.msra.mxu0 0
    %405 = vmatprep.subr.bf16.mxu0 0
    %406 = vmatpush1.bf16.msra.mxu0 0
    %407 = vmatprep.subr.bf16.mxu0 0
    %408 = vmatpush1.bf16.msra.mxu0 0
    %409 = vmatprep.subr.bf16.mxu0 0
    %410 = vmatpush1.bf16.msra.mxu0 0
    %411 = vmatprep.subr.bf16.mxu0 0
    %412 = vmatpush1.bf16.msra.mxu0 0
    %413 = vmatprep.subr.bf16.mxu0 0
    %414 = vmatpush1.bf16.msra.mxu0 0
    %415 = vmatprep.subr.bf16.mxu0 0
    %416 = vmatpush1.bf16.msra.mxu0 0
    %417 = vmatprep.subr.bf16.mxu0 0
    %418 = vmatpush1.bf16.msra.mxu0 0
    %419 = vmatprep.subr.bf16.mxu0 0
    %420 = vmatpush1.bf16.msra.mxu0 0
    %421 = vmatprep.subr.bf16.mxu0 0
    %422 = vmatpush1.bf16.msra.mxu0 0
    %423 = vmatprep.subr.bf16.mxu0 0
    %424 = vmatpush1.bf16.msra.mxu0 0
    %425 = vmatprep.subr.bf16.mxu0 0
    %426 = vmatpush1.bf16.msra.mxu0 0
    %427 = vmatprep.subr.bf16.mxu0 0
    %428 = vmatpush1.bf16.msra.mxu0 0
    %429 = vmatprep.mubr.bf16.mxu0 0
    %430 = vmatmul.mubr.bf16.gmra.mrb[0].mxu0 %v350
    %v431 = vpop.f32.mrb[0].mxu0
    %v432 = vadd.f32 %v342, %v431
    %v433 = vpop.f32.mrb[0].mxu0
    %v434 = vpop.f32.mrb[0].mxu0
    %v435 = vadd.f32 %v342, %v434
    %v436 = vpop.f32.mrb[0].mxu0
    %437 = vmatprep.mubr.bf16.mxu0 0
    %438 = vmatmul.mubr.bf16.gmra.mrb[0].mxu0 %v353
    %v439 = vpop.f32.mrb[0].mxu0
    %v440 = vadd.f32 %v342, %v439
    %v441 = vpop.f32.mrb[0].mxu0
    %v442 = vpop.f32.mrb[0].mxu0
    %v443 = vadd.f32 %v342, %v442
    %v444 = vpop.f32.mrb[0].mxu0
    %445 = vmatprep.mubr.bf16.mxu0 0
    %446 = vmatmul.mubr.bf16.gmra.mrb[0].mxu0 %v356
    %v447 = vpop.f32.mrb[0].mxu0
    %v448 = vadd.f32 %v342, %v447
    %v449 = vpop.f32.mrb[0].mxu0
    %v450 = vpop.f32.mrb[0].mxu0
    %v451 = vadd.f32 %v342, %v450
    %v452 = vpop.f32.mrb[0].mxu0
    %453 = vmatprep.mubr.bf16.mxu0 0
    %454 = vmatmul.mubr.bf16.gmra.mrb[0].mxu0 %v359
    %v455 = vpop.f32.mrb[0].mxu0
    %v456 = vadd.f32 %v342, %v455
    %v457 = vpop.f32.mrb[0].mxu0
    %v458 = vpop.f32.mrb[0].mxu0
    %v459 = vadd.f32 %v342, %v458
    %v460 = vpop.f32.mrb[0].mxu0
    %461 = vmatprep.mubr.bf16.mxu0 0
    %462 = vmatmul.mubr.bf16.gmra.mrb[0].mxu0 %v362
    %v463 = vpop.f32.mrb[0].mxu0
    %v464 = vadd.f32 %v342, %v463
    %v465 = vpop.f32.mrb[0].mxu0
    %v466 = vpop.f32.mrb[0].mxu0
    %v467 = vadd.f32 %v342, %v466
    %v468 = vpop.f32.mrb[0].mxu0
    %469 = vmatprep.mubr.bf16.mxu0 0
    %470 = vmatmul.mubr.bf16.gmra.mrb[0].mxu0 %v365
    %v471 = vpop.f32.mrb[0].mxu0
    %v472 = vadd.f32 %v342, %v471
    %v473 = vpop.f32.mrb[0].mxu0
    %v474 = vpop.f32.mrb[0].mxu0
    %v475 = vadd.f32 %v342, %v474
    %v476 = vpop.f32.mrb[0].mxu0
    %477 = vmatprep.mubr.bf16.mxu0 0
    %478 = vmatmul.mubr.bf16.gmra.mrb[0].mxu0 %v368
    %v479 = vpop.f32.mrb[0].mxu0
    %v480 = vadd.f32 %v342, %v479
    %v481 = vpop.f32.mrb[0].mxu0
    %v482 = vpop.f32.mrb[0].mxu0
    %v483 = vadd.f32 %v342, %v482
    %v484 = vpop.f32.mrb[0].mxu0
    %485 = vmatprep.mubr.bf16.mxu0 0
    %486 = vmatmul.mubr.bf16.gmra.mrb[0].mxu0 %v371
    %v487 = vpop.f32.mrb[0].mxu0
    %v488 = vadd.f32 %v342, %v487
    %v489 = vpop.f32.mrb[0].mxu0
    %v490 = vpop.f32.mrb[0].mxu0
    %v491 = vadd.f32 %v342, %v490
    %v492 = vpop.f32.mrb[0].mxu0
    %493 = vmatprep.mubr.bf16.mxu0 0
    %494 = vmatmul.mubr.bf16.gmra.mrb[0].mxu0 %v374
    %v495 = vpop.f32.mrb[0].mxu0
    %v496 = vadd.f32 %v342, %v495
    %v497 = vpop.f32.mrb[0].mxu0
    %v498 = vpop.f32.mrb[0].mxu0
    %v499 = vadd.f32 %v342, %v498
    %v500 = vpop.f32.mrb[0].mxu0
    %501 = vmatprep.mubr.bf16.mxu0 0
    %502 = vmatmul.mubr.bf16.gmra.mrb[0].mxu0 %v377
    %v503 = vpop.f32.mrb[0].mxu0
    %v504 = vadd.f32 %v342, %v503
    %v505 = vpop.f32.mrb[0].mxu0
    %v506 = vpop.f32.mrb[0].mxu0
    %v507 = vadd.f32 %v342, %v506
    %v508 = vpop.f32.mrb[0].mxu0
    %509 = vmatprep.mubr.bf16.mxu0 0
    %510 = vmatmul.mubr.bf16.gmra.mrb[0].mxu0 %v380
    %v511 = vpop.f32.mrb[0].mxu0
    %v512 = vadd.f32 %v342, %v511
    %v513 = vpop.f32.mrb[0].mxu0
    %v514 = vpop.f32.mrb[0].mxu0
    %v515 = vadd.f32 %v342, %v514
    %v516 = vpop.f32.mrb[0].mxu0
    %517 = vmatprep.mubr.bf16.mxu0 0
    %518 = vmatmul.mubr.bf16.gmra.mrb[0].mxu0 %v383
    %v519 = vpop.f32.mrb[0].mxu0
    %v520 = vadd.f32 %v342, %v519
    %v521 = vpop.f32.mrb[0].mxu0
    %v522 = vpop.f32.mrb[0].mxu0
    %v523 = vadd.f32 %v342, %v522
    %v524 = vpop.f32.mrb[0].mxu0
    %525 = vmatprep.mubr.bf16.mxu0 0
    %526 = vmatmul.mubr.bf16.gmra.mrb[0].mxu0 %v386
    %v527 = vpop.f32.mrb[0].mxu0
    %v528 = vadd.f32 %v342, %v527
    %v529 = vpop.f32.mrb[0].mxu0
    %v530 = vpop.f32.mrb[0].mxu0
    %v531 = vadd.f32 %v342, %v530
    %v532 = vpop.f32.mrb[0].mxu0
    %533 = vmatprep.mubr.bf16.mxu0 0
    %534 = vmatmul.mubr.bf16.gmra.mrb[0].mxu0 %v389
    %v535 = vpop.f32.mrb[0].mxu0
    %v536 = vadd.f32 %v342, %v535
    %v537 = vpop.f32.mrb[0].mxu0
    %v538 = vpop.f32.mrb[0].mxu0
    %v539 = vadd.f32 %v342, %v538
    %v540 = vpop.f32.mrb[0].mxu0
    %541 = vmatprep.mubr.bf16.mxu0 0
    %542 = vmatmul.mubr.bf16.gmra.mrb[0].mxu0 %v392
    %v543 = vpop.f32.mrb[0].mxu0
    %v544 = vadd.f32 %v342, %v543
    %v545 = vpop.f32.mrb[0].mxu0
    %v546 = vpop.f32.mrb[0].mxu0
    %v547 = vadd.f32 %v342, %v546
    %v548 = vpop.f32.mrb[0].mxu0
    %549 = vmatprep.mubr.bf16.mxu0 0
    %550 = vmatmul.mubr.bf16.gmra.mrb[0].mxu0 %v395
    %v551 = vpop.f32.mrb[0].mxu0
    %v552 = vadd.f32 %v342, %v551
    %v553 = vpop.f32.mrb[0].mxu0
    %v554 = vpop.f32.mrb[0].mxu0
    %v555 = vadd.f32 %v342, %v554
    %v556 = vpop.f32.mrb[0].mxu0
    %557 = vdwg.mxu0
    %v558 = vmax.f32 %v432, 0.0
    %v559 = vmax.f32 %v435, 0.0
    %v560 = vmax.f32 %v440, 0.0
    %v561 = vmax.f32 %v443, 0.0
    %v562 = vmax.f32 %v448, 0.0
    %v563 = vmax.f32 %v451, 0.0
    %v564 = vmax.f32 %v456, 0.0
    %v565 = vmax.f32 %v459, 0.0
    %v566 = vmax.f32 %v464, 0.0
    %v567 = vmax.f32 %v467, 0.0
    %v568 = vmax.f32 %v472, 0.0
    %v569 = vmax.f32 %v475, 0.0
    %v570 = vmax.f32 %v480, 0.0
    %v571 = vmax.f32 %v483, 0.0
    %v572 = vmax.f32 %v488, 0.0
    %v573 = vmax.f32 %v491, 0.0
    %v574 = vmax.f32 %v496, 0.0
    %v575 = vmax.f32 %v499, 0.0
    %v576 = vmax.f32 %v504, 0.0
    %v577 = vmax.f32 %v507, 0.0
    %v578 = vmax.f32 %v512, 0.0
    %v579 = vmax.f32 %v515, 0.0
    %v580 = vmax.f32 %v520, 0.0
    %v581 = vmax.f32 %v523, 0.0
    %v582 = vmax.f32 %v528, 0.0
    %v583 = vmax.f32 %v531, 0.0
    %v584 = vmax.f32 %v536, 0.0
    %v585 = vmax.f32 %v539, 0.0
    %v586 = vmax.f32 %v544, 0.0
    %v587 = vmax.f32 %v547, 0.0
    %v588 = vmax.f32 %v552, 0.0
    %v589 = vmax.f32 %v555, 0.0
    %v590 = vpack.c.bf16 %v559, %v558
    %v591 = vpack.c.bf16 %v561, %v560
    %v592 = vpack.c.bf16 %v563, %v562
    %v593 = vpack.c.bf16 %v565, %v564
    %v594 = vpack.c.bf16 %v567, %v566
    %v595 = vpack.c.bf16 %v569, %v568
    %v596 = vpack.c.bf16 %v571, %v570
    %v597 = vpack.c.bf16 %v573, %v572
    %v598 = vpack.c.bf16 %v575, %v574
    %v599 = vpack.c.bf16 %v577, %v576
    %v600 = vpack.c.bf16 %v579, %v578
    %v601 = vpack.c.bf16 %v581, %v580
    %v602 = vpack.c.bf16 %v583, %v582
    %v603 = vpack.c.bf16 %v585, %v584
    %v604 = vpack.c.bf16 %v587, %v586
    %v605 = vpack.c.bf16 %v589, %v588
    %v606 = vld [vmem:[%s1 + $0x10] sm:$0xf]
    %v607 = vld [vmem:[%s1 + $0x14] sm:$0xf]
    %v608 = vlaneseq
    %v609 = vshrl.u32 %v608, 7
    %v610 = vsub.s32 2, %v609
    %v611 = vrot.slane %v14, %v610
    %v614 = vunpack.c.l.b16 %v606
    %v615 = vunpack.c.l.b16 %v607
    %v616 = vpack.c.b16 %v615, %v614
    %v619 = vsel %vm79, %v590, 0
    %v622 = vsel %vm79, %v591, 0
    %v625 = vsel %vm79, %v592, 0
    %v628 = vsel %vm79, %v593, 0
    %v631 = vsel %vm79, %v594, 0
    %v634 = vsel %vm79, %v595, 0
    %v637 = vsel %vm79, %v596, 0
    %v640 = vsel %vm79, %v597, 0
    %v643 = vsel %vm79, %v598, 0
    %v646 = vsel %vm79, %v599, 0
    %v649 = vsel %vm79, %v600, 0
    %v652 = vsel %vm79, %v601, 0
    %v655 = vsel %vm79, %v602, 0
    %v658 = vsel %vm79, %v603, 0
    %v661 = vsel %vm79, %v604, 0
    %v664 = vsel %vm79, %v605, 0
    %666 = vmatprep.subr.bf16.mxu0 0
    %667 = vmatpush1.bf16.msra.mxu0 %v616
    %668 = vmatprep.subr.bf16.mxu0 0
    %669 = vmatpush1.bf16.msra.mxu0 0
    %670 = vmatprep.subr.bf16.mxu0 0
    %671 = vmatpush1.bf16.msra.mxu0 0
    %672 = vmatprep.subr.bf16.mxu0 0
    %673 = vmatpush1.bf16.msra.mxu0 0
    %674 = vmatprep.subr.bf16.mxu0 0
    %675 = vmatpush1.bf16.msra.mxu0 0
    %676 = vmatprep.subr.bf16.mxu0 0
    %677 = vmatpush1.bf16.msra.mxu0 0
    %678 = vmatprep.subr.bf16.mxu0 0
    %679 = vmatpush1.bf16.msra.mxu0 0
    %680 = vmatprep.subr.bf16.mxu0 0
    %681 = vmatpush1.bf16.msra.mxu0 0
    %682 = vmatprep.subr.bf16.mxu0 0
    %683 = vmatpush1.bf16.msra.mxu0 0
    %684 = vmatprep.subr.bf16.mxu0 0
    %685 = vmatpush1.bf16.msra.mxu0 0
    %686 = vmatprep.subr.bf16.mxu0 0
    %687 = vmatpush1.bf16.msra.mxu0 0
    %688 = vmatprep.subr.bf16.mxu0 0
    %689 = vmatpush1.bf16.msra.mxu0 0
    %690 = vmatprep.subr.bf16.mxu0 0
    %691 = vmatpush1.bf16.msra.mxu0 0
    %692 = vmatprep.subr.bf16.mxu0 0
    %693 = vmatpush1.bf16.msra.mxu0 0
    %694 = vmatprep.subr.bf16.mxu0 0
    %695 = vmatpush1.bf16.msra.mxu0 0
    %696 = vmatprep.subr.bf16.mxu0 0
    %697 = vmatpush1.bf16.msra.mxu0 0
    %698 = vmatprep.mubr.bf16.mxu0 0
    %699 = vmatmul.mubr.bf16.gmra.mrb[0].mxu0 %v619
    %v700 = vpop.f32.mrb[0].mxu0
    %v701 = vadd.f32 %v611, %v700
    %v702 = vpop.f32.mrb[0].mxu0
    %v703 = vpop.f32.mrb[0].mxu0
    %v704 = vadd.f32 %v611, %v703
    %v705 = vpop.f32.mrb[0].mxu0
    %706 = vmatprep.mubr.bf16.mxu0 0
    %707 = vmatmul.mubr.bf16.gmra.mrb[0].mxu0 %v622
    %v708 = vpop.f32.mrb[0].mxu0
    %v709 = vadd.f32 %v611, %v708
    %v710 = vpop.f32.mrb[0].mxu0
    %v711 = vpop.f32.mrb[0].mxu0
    %v712 = vadd.f32 %v611, %v711
    %v713 = vpop.f32.mrb[0].mxu0
    %714 = vmatprep.mubr.bf16.mxu0 0
    %715 = vmatmul.mubr.bf16.gmra.mrb[0].mxu0 %v625
    %v716 = vpop.f32.mrb[0].mxu0
    %v717 = vadd.f32 %v611, %v716
    %v718 = vpop.f32.mrb[0].mxu0
    %v719 = vpop.f32.mrb[0].mxu0
    %v720 = vadd.f32 %v611, %v719
    %v721 = vpop.f32.mrb[0].mxu0
    %722 = vmatprep.mubr.bf16.mxu0 0
    %723 = vmatmul.mubr.bf16.gmra.mrb[0].mxu0 %v628
    %v724 = vpop.f32.mrb[0].mxu0
    %v725 = vadd.f32 %v611, %v724
    %v726 = vpop.f32.mrb[0].mxu0
    %v727 = vpop.f32.mrb[0].mxu0
    %v728 = vadd.f32 %v611, %v727
    %v729 = vpop.f32.mrb[0].mxu0
    %730 = vmatprep.mubr.bf16.mxu0 0
    %731 = vmatmul.mubr.bf16.gmra.mrb[0].mxu0 %v631
    %v732 = vpop.f32.mrb[0].mxu0
    %v733 = vadd.f32 %v611, %v732
    %v734 = vpop.f32.mrb[0].mxu0
    %v735 = vpop.f32.mrb[0].mxu0
    %v736 = vadd.f32 %v611, %v735
    %v737 = vpop.f32.mrb[0].mxu0
    %738 = vmatprep.mubr.bf16.mxu0 0
    %739 = vmatmul.mubr.bf16.gmra.mrb[0].mxu0 %v634
    %v740 = vpop.f32.mrb[0].mxu0
    %v741 = vadd.f32 %v611, %v740
    %v742 = vpop.f32.mrb[0].mxu0
    %v743 = vpop.f32.mrb[0].mxu0
    %v744 = vadd.f32 %v611, %v743
    %v745 = vpop.f32.mrb[0].mxu0
    %746 = vmatprep.mubr.bf16.mxu0 0
    %747 = vmatmul.mubr.bf16.gmra.mrb[0].mxu0 %v637
    %v748 = vpop.f32.mrb[0].mxu0
    %v749 = vadd.f32 %v611, %v748
    %v750 = vpop.f32.mrb[0].mxu0
    %v751 = vpop.f32.mrb[0].mxu0
    %v752 = vadd.f32 %v611, %v751
    %v753 = vpop.f32.mrb[0].mxu0
    %754 = vmatprep.mubr.bf16.mxu0 0
    %755 = vmatmul.mubr.bf16.gmra.mrb[0].mxu0 %v640
    %v756 = vpop.f32.mrb[0].mxu0
    %v757 = vadd.f32 %v611, %v756
    %v758 = vpop.f32.mrb[0].mxu0
    %v759 = vpop.f32.mrb[0].mxu0
    %v760 = vadd.f32 %v611, %v759
    %v761 = vpop.f32.mrb[0].mxu0
    %762 = vmatprep.mubr.bf16.mxu0 0
    %763 = vmatmul.mubr.bf16.gmra.mrb[0].mxu0 %v643
    %v764 = vpop.f32.mrb[0].mxu0
    %v765 = vadd.f32 %v611, %v764
    %v766 = vpop.f32.mrb[0].mxu0
    %v767 = vpop.f32.mrb[0].mxu0
    %v768 = vadd.f32 %v611, %v767
    %v769 = vpop.f32.mrb[0].mxu0
    %770 = vmatprep.mubr.bf16.mxu0 0
    %771 = vmatmul.mubr.bf16.gmra.mrb[0].mxu0 %v646
    %v772 = vpop.f32.mrb[0].mxu0
    %v773 = vadd.f32 %v611, %v772
    %v774 = vpop.f32.mrb[0].mxu0
    %v775 = vpop.f32.mrb[0].mxu0
    %v776 = vadd.f32 %v611, %v775
    %v777 = vpop.f32.mrb[0].mxu0
    %778 = vmatprep.mubr.bf16.mxu0 0
    %779 = vmatmul.mubr.bf16.gmra.mrb[0].mxu0 %v649
    %v780 = vpop.f32.mrb[0].mxu0
    %v781 = vadd.f32 %v611, %v780
    %v782 = vpop.f32.mrb[0].mxu0
    %v783 = vpop.f32.mrb[0].mxu0
    %v784 = vadd.f32 %v611, %v783
    %v785 = vpop.f32.mrb[0].mxu0
    %786 = vmatprep.mubr.bf16.mxu0 0
    %787 = vmatmul.mubr.bf16.gmra.mrb[0].mxu0 %v652
    %v788 = vpop.f32.mrb[0].mxu0
    %v789 = vadd.f32 %v611, %v788
    %v790 = vpop.f32.mrb[0].mxu0
    %v791 = vpop.f32.mrb[0].mxu0
    %v792 = vadd.f32 %v611, %v791
    %v793 = vpop.f32.mrb[0].mxu0
    %794 = vmatprep.mubr.bf16.mxu0 0
    %795 = vmatmul.mubr.bf16.gmra.mrb[0].mxu0 %v655
    %v796 = vpop.f32.mrb[0].mxu0
    %v797 = vadd.f32 %v611, %v796
    %v798 = vpop.f32.mrb[0].mxu0
    %v799 = vpop.f32.mrb[0].mxu0
    %v800 = vadd.f32 %v611, %v799
    %v801 = vpop.f32.mrb[0].mxu0
    %802 = vmatprep.mubr.bf16.mxu0 0
    %803 = vmatmul.mubr.bf16.gmra.mrb[0].mxu0 %v658
    %v804 = vpop.f32.mrb[0].mxu0
    %v805 = vadd.f32 %v611, %v804
    %v806 = vpop.f32.mrb[0].mxu0
    %v807 = vpop.f32.mrb[0].mxu0
    %v808 = vadd.f32 %v611, %v807
    %v809 = vpop.f32.mrb[0].mxu0
    %810 = vmatprep.mubr.bf16.mxu0 0
    %811 = vmatmul.mubr.bf16.gmra.mrb[0].mxu0 %v661
    %v812 = vpop.f32.mrb[0].mxu0
    %v813 = vadd.f32 %v611, %v812
    %v814 = vpop.f32.mrb[0].mxu0
    %v815 = vpop.f32.mrb[0].mxu0
    %v816 = vadd.f32 %v611, %v815
    %v817 = vpop.f32.mrb[0].mxu0
    %818 = vmatprep.mubr.bf16.mxu0 0
    %819 = vmatmul.mubr.bf16.gmra.mrb[0].mxu0 %v664
    %v820 = vpop.f32.mrb[0].mxu0
    %v821 = vadd.f32 %v611, %v820
    %v822 = vpop.f32.mrb[0].mxu0
    %v823 = vpop.f32.mrb[0].mxu0
    %v824 = vadd.f32 %v611, %v823
    %v825 = vpop.f32.mrb[0].mxu0
    %826 = vdwg.mxu0
    %v827 = vmax.f32 %v701, 0.0
    %v828 = vmax.f32 %v704, 0.0
    %v829 = vmax.f32 %v709, 0.0
    %v830 = vmax.f32 %v712, 0.0
    %v831 = vmax.f32 %v717, 0.0
    %v832 = vmax.f32 %v720, 0.0
    %v833 = vmax.f32 %v725, 0.0
    %v834 = vmax.f32 %v728, 0.0
    %v835 = vmax.f32 %v733, 0.0
    %v836 = vmax.f32 %v736, 0.0
    %v837 = vmax.f32 %v741, 0.0
    %v838 = vmax.f32 %v744, 0.0
    %v839 = vmax.f32 %v749, 0.0
    %v840 = vmax.f32 %v752, 0.0
    %v841 = vmax.f32 %v757, 0.0
    %v842 = vmax.f32 %v760, 0.0
    %v843 = vmax.f32 %v765, 0.0
    %v844 = vmax.f32 %v768, 0.0
    %v845 = vmax.f32 %v773, 0.0
    %v846 = vmax.f32 %v776, 0.0
    %v847 = vmax.f32 %v781, 0.0
    %v848 = vmax.f32 %v784, 0.0
    %v849 = vmax.f32 %v789, 0.0
    %v850 = vmax.f32 %v792, 0.0
    %v851 = vmax.f32 %v797, 0.0
    %v852 = vmax.f32 %v800, 0.0
    %v853 = vmax.f32 %v805, 0.0
    %v854 = vmax.f32 %v808, 0.0
    %v855 = vmax.f32 %v813, 0.0
    %v856 = vmax.f32 %v816, 0.0
    %v857 = vmax.f32 %v821, 0.0
    %v858 = vmax.f32 %v824, 0.0
    %v859 = vmax.f32 %v827, %v831
    %v860 = vmax.f32 %v828, %v832
    %v861 = vmax.f32 %v829, %v833
    %v862 = vmax.f32 %v830, %v834
    %v863 = vmax.f32 %v835, %v839
    %v864 = vmax.f32 %v836, %v840
    %v865 = vmax.f32 %v837, %v841
    %v866 = vmax.f32 %v838, %v842
    %v867 = vmax.f32 %v843, %v847
    %v868 = vmax.f32 %v844, %v848
    %v869 = vmax.f32 %v845, %v849
    %v870 = vmax.f32 %v846, %v850
    %v871 = vmax.f32 %v851, %v855
    %v872 = vmax.f32 %v852, %v856
    %v873 = vmax.f32 %v853, %v857
    %v874 = vmax.f32 %v854, %v858
    %v875 = vmax.f32 %v859, %v863
    %v876 = vmax.f32 %v860, %v864
    %v877 = vmax.f32 %v861, %v865
    %v878 = vmax.f32 %v862, %v866
    %v879 = vmax.f32 %v867, %v871
    %v880 = vmax.f32 %v868, %v872
    %v881 = vmax.f32 %v869, %v873
    %v882 = vmax.f32 %v870, %v874
    %v883 = vmax.f32 %v875, %v879
    %v884 = vmax.f32 %v876, %v880
    %v885 = vmax.f32 %v877, %v881
    %v886 = vmax.f32 %v878, %v882
    %v887 = vpack.c.bf16 %v48, %v47
    %v888 = vpack.c.bf16 %v50, %v49
    %v889 = vld [vmem:[%s1 + $0x18] sm:$0xf]
    %v890 = vld [vmem:[%s1 + $0x1c] sm:$0xf]
    %v891 = vpack.c.bf16 %v884, %v883
    %v892 = vpack.c.bf16 %v886, %v885
    %v893 = vld [vmem:[%s1 + $0x20] sm:$0xf]
    %v894 = vld [vmem:[%s1 + $0x24] sm:$0xf]
    %v895 = vld [vmem:[%s1 + $0x28] sm:$0xf]
    %v896 = vld [vmem:[%s1 + $0x2c] sm:$0xf]
    %v901 = vunpack.c.l.b16 %v893
    %v902 = vunpack.c.l.b16 %v894
    %v903 = vunpack.c.l.b16 %v895
    %v904 = vunpack.c.l.b16 %v896
    %v905 = vpack.c.b16 %v902, %v901
    %v906 = vpack.c.b16 %v904, %v903
    %vm909 = vcmask 261120
    %v911 = vsel %vm909, %v891, 0
    %v914 = vsel %vm909, %v892, 0
    %916 = vmatprep.subr.bf16.mxu0 0
    %917 = vmatpush1.bf16.msra.mxu0 %v905
    %918 = vmatprep.subr.bf16.mxu0 0
    %919 = vmatpush1.bf16.msra.mxu0 %v906
    %920 = vmatprep.subr.bf16.mxu0 0
    %921 = vmatpush1.bf16.msra.mxu0 0
    %922 = vmatprep.subr.bf16.mxu0 0
    %923 = vmatpush1.bf16.msra.mxu0 0
    %924 = vmatprep.subr.bf16.mxu0 0
    %925 = vmatpush1.bf16.msra.mxu0 0
    %926 = vmatprep.subr.bf16.mxu0 0
    %927 = vmatpush1.bf16.msra.mxu0 0
    %928 = vmatprep.subr.bf16.mxu0 0
    %929 = vmatpush1.bf16.msra.mxu0 0
    %930 = vmatprep.subr.bf16.mxu0 0
    %931 = vmatpush1.bf16.msra.mxu0 0
    %932 = vmatprep.subr.bf16.mxu0 0
    %933 = vmatpush1.bf16.msra.mxu0 0
    %934 = vmatprep.subr.bf16.mxu0 0
    %935 = vmatpush1.bf16.msra.mxu0 0
    %936 = vmatprep.subr.bf16.mxu0 0
    %937 = vmatpush1.bf16.msra.mxu0 0
    %938 = vmatprep.subr.bf16.mxu0 0
    %939 = vmatpush1.bf16.msra.mxu0 0
    %940 = vmatprep.subr.bf16.mxu0 0
    %941 = vmatpush1.bf16.msra.mxu0 0
    %942 = vmatprep.subr.bf16.mxu0 0
    %943 = vmatpush1.bf16.msra.mxu0 0
    %944 = vmatprep.subr.bf16.mxu0 0
    %945 = vmatpush1.bf16.msra.mxu0 0
    %946 = vmatprep.subr.bf16.mxu0 0
    %947 = vmatpush1.bf16.msra.mxu0 0
    %948 = vmatprep.mubr.bf16.mxu0 0
    %949 = vmatmul.mubr.bf16.gmra.mrb[0].mxu0 %v911
    %v950 = vpop.f32.mrb[0].mxu0
    %v951 = vadd.f32 0.0, %v950
    %v952 = vpop.f32.mrb[0].mxu0
    %v953 = vpop.f32.mrb[0].mxu0
    %v954 = vadd.f32 0.0, %v953
    %v955 = vpop.f32.mrb[0].mxu0
    %956 = vmatprep.mubr.bf16.mxu0 0
    %957 = vmatmul.mubr.bf16.gmra.mrb[0].mxu0 %v914
    %v958 = vpop.f32.mrb[0].mxu0
    %v959 = vadd.f32 0.0, %v958
    %v960 = vpop.f32.mrb[0].mxu0
    %v961 = vpop.f32.mrb[0].mxu0
    %v962 = vadd.f32 0.0, %v961
    %v963 = vpop.f32.mrb[0].mxu0
    %964 = vdwg.mxu0
    %v967 = vunpack.c.l.b16 %v889
    %v968 = vunpack.c.l.b16 %v890
    %v969 = vpack.c.b16 %v968, %v967
    %v972 = vsel %vm79, %v887, 0
    %v975 = vsel %vm79, %v888, 0
    %977 = vmatprep.subr.bf16.mxu0 0
    %978 = vmatpush1.bf16.msra.mxu0 %v969
    %979 = vmatprep.subr.bf16.mxu0 0
    %980 = vmatpush1.bf16.msra.mxu0 0
    %981 = vmatprep.subr.bf16.mxu0 0
    %982 = vmatpush1.bf16.msra.mxu0 0
    %983 = vmatprep.subr.bf16.mxu0 0
    %984 = vmatpush1.bf16.msra.mxu0 0
    %985 = vmatprep.subr.bf16.mxu0 0
    %986 = vmatpush1.bf16.msra.mxu0 0
    %987 = vmatprep.subr.bf16.mxu0 0
    %988 = vmatpush1.bf16.msra.mxu0 0
    %989 = vmatprep.subr.bf16.mxu0 0
    %990 = vmatpush1.bf16.msra.mxu0 0
    %991 = vmatprep.subr.bf16.mxu0 0
    %992 = vmatpush1.bf16.msra.mxu0 0
    %993 = vmatprep.subr.bf16.mxu0 0
    %994 = vmatpush1.bf16.msra.mxu0 0
    %995 = vmatprep.subr.bf16.mxu0 0
    %996 = vmatpush1.bf16.msra.mxu0 0
    %997 = vmatprep.subr.bf16.mxu0 0
    %998 = vmatpush1.bf16.msra.mxu0 0
    %999 = vmatprep.subr.bf16.mxu0 0
    %1000 = vmatpush1.bf16.msra.mxu0 0
    %1001 = vmatprep.subr.bf16.mxu0 0
    %1002 = vmatpush1.bf16.msra.mxu0 0
    %1003 = vmatprep.subr.bf16.mxu0 0
    %1004 = vmatpush1.bf16.msra.mxu0 0
    %1005 = vmatprep.subr.bf16.mxu0 0
    %1006 = vmatpush1.bf16.msra.mxu0 0
    %1007 = vmatprep.subr.bf16.mxu0 0
    %1008 = vmatpush1.bf16.msra.mxu0 0
    %1009 = vmatprep.mubr.bf16.mxu0 0
    %1010 = vmatmul.mubr.bf16.gmra.mrb[0].mxu0 %v972
    %v1011 = vpop.f32.mrb[0].mxu0
    %v1012 = vadd.f32 %v951, %v1011
    %v1013 = vpop.f32.mrb[0].mxu0
    %v1014 = vpop.f32.mrb[0].mxu0
    %v1015 = vadd.f32 %v954, %v1014
    %v1016 = vpop.f32.mrb[0].mxu0
    %1017 = vmatprep.mubr.bf16.mxu0 0
    %1018 = vmatmul.mubr.bf16.gmra.mrb[0].mxu0 %v975
    %v1019 = vpop.f32.mrb[0].mxu0
    %v1020 = vadd.f32 %v959, %v1019
    %v1021 = vpop.f32.mrb[0].mxu0
    %v1022 = vpop.f32.mrb[0].mxu0
    %v1023 = vadd.f32 %v962, %v1022
    %v1024 = vpop.f32.mrb[0].mxu0
    %1025 = vdwg.mxu0
    %v1026 = vlaneseq
    %v1027 = vshrl.u32 %v1026, 7
    %v1028 = vsub.s32 3, %v1027
    %v1029 = vrot.slane %v14, %v1028
    %v1030 = vadd.f32 %v1012, %v1029
    %v1031 = vadd.f32 %v1015, %v1029
    %v1032 = vadd.f32 %v1020, %v1029
    %v1033 = vadd.f32 %v1023, %v1029
    %v1034 = vmax.f32 %v1030, 0.0
    %v1035 = vmax.f32 %v1031, 0.0
    %v1036 = vmax.f32 %v1032, 0.0
    %v1037 = vmax.f32 %v1033, 0.0
    %v1038 = vpack.c.bf16 %v1035, %v1034
    %v1039 = vpack.c.bf16 %v1037, %v1036
    %v1040 = vld [vmem:[%s1 + $0x30] sm:$0xf]
    %v1041 = vld [vmem:[%s1 + $0x34] sm:$0xf]
    %v1042 = vld [vmem:[%s1 + $0x38] sm:$0xf]
    %v1043 = vld [vmem:[%s1 + $0x3c] sm:$0xf]
    %v1044 = vlaneseq
    %v1045 = vshrl.u32 %v1044, 7
    %v1046 = vsub.s32 4, %v1045
    %v1047 = vrot.slane %v14, %v1046
    %v1052 = vunpack.c.l.b16 %v1040
    %v1053 = vunpack.c.l.b16 %v1041
    %v1054 = vunpack.c.l.b16 %v1042
    %v1055 = vunpack.c.l.b16 %v1043
    %v1056 = vpack.c.b16 %v1053, %v1052
    %v1057 = vpack.c.b16 %v1055, %v1054
    %v1061 = vsel %vm909, %v1038, 0
    %v1064 = vsel %vm909, %v1039, 0
    %1066 = vmatprep.subr.bf16.mxu0 0
    %1067 = vmatpush1.bf16.msra.mxu0 %v1056
    %1068 = vmatprep.subr.bf16.mxu0 0
    %1069 = vmatpush1.bf16.msra.mxu0 %v1057
    %1070 = vmatprep.subr.bf16.mxu0 0
    %1071 = vmatpush1.bf16.msra.mxu0 0
    %1072 = vmatprep.subr.bf16.mxu0 0
    %1073 = vmatpush1.bf16.msra.mxu0 0
    %1074 = vmatprep.subr.bf16.mxu0 0
    %1075 = vmatpush1.bf16.msra.mxu0 0
    %1076 = vmatprep.subr.bf16.mxu0 0
    %1077 = vmatpush1.bf16.msra.mxu0 0
    %1078 = vmatprep.subr.bf16.mxu0 0
    %1079 = vmatpush1.bf16.msra.mxu0 0
    %1080 = vmatprep.subr.bf16.mxu0 0
    %1081 = vmatpush1.bf16.msra.mxu0 0
    %1082 = vmatprep.subr.bf16.mxu0 0
    %1083 = vmatpush1.bf16.msra.mxu0 0
    %1084 = vmatprep.subr.bf16.mxu0 0
    %1085 = vmatpush1.bf16.msra.mxu0 0
    %1086 = vmatprep.subr.bf16.mxu0 0
    %1087 = vmatpush1.bf16.msra.mxu0 0
    %1088 = vmatprep.subr.bf16.mxu0 0
    %1089 = vmatpush1.bf16.msra.mxu0 0
    %1090 = vmatprep.subr.bf16.mxu0 0
    %1091 = vmatpush1.bf16.msra.mxu0 0
    %1092 = vmatprep.subr.bf16.mxu0 0
    %1093 = vmatpush1.bf16.msra.mxu0 0
    %1094 = vmatprep.subr.bf16.mxu0 0
    %1095 = vmatpush1.bf16.msra.mxu0 0
    %1096 = vmatprep.subr.bf16.mxu0 0
    %1097 = vmatpush1.bf16.msra.mxu0 0
    %1098 = vmatprep.mubr.bf16.mxu0 0
    %1099 = vmatmul.mubr.bf16.gmra.mrb[0].mxu0 %v1061
    %v1100 = vpop.f32.mrb[0].mxu0
    %v1101 = vadd.f32 %v1047, %v1100
    %v1102 = vpop.f32.mrb[0].mxu0
    %v1103 = vpop.f32.mrb[0].mxu0
    %v1104 = vadd.f32 %v1047, %v1103
    %v1105 = vpop.f32.mrb[0].mxu0
    %1106 = vmatprep.mubr.bf16.mxu0 0
    %1107 = vmatmul.mubr.bf16.gmra.mrb[0].mxu0 %v1064
    %v1108 = vpop.f32.mrb[0].mxu0
    %v1109 = vadd.f32 %v1047, %v1108
    %v1110 = vpop.f32.mrb[0].mxu0
    %v1111 = vpop.f32.mrb[0].mxu0
    %v1112 = vadd.f32 %v1047, %v1111
    %v1113 = vpop.f32.mrb[0].mxu0
    %1114 = vdwg.mxu0
    %v1115 = vmax.f32 %v1101, 0.0
    %v1116 = vmax.f32 %v1104, 0.0
    %v1117 = vmax.f32 %v1109, 0.0
    %v1118 = vmax.f32 %v1112, 0.0
    %v1119 = vpack.c.bf16 %v1116, %v1115
    %v1120 = vpack.c.bf16 %v1118, %v1117
    %v1121 = vld [vmem:[%s1 + $0x40] sm:$0xf]
    %v1122 = vld [vmem:[%s1 + $0x44] sm:$0xf]
    %v1123 = vld [vmem:[%s1 + $0x48] sm:$0xf]
    %v1124 = vld [vmem:[%s1 + $0x4c] sm:$0xf]
    %v1125 = vlaneseq
    %v1126 = vshrl.u32 %v1125, 7
    %v1127 = vsub.s32 5, %v1126
    %v1128 = vrot.slane %v14, %v1127
    %v1133 = vunpack.c.l.b16 %v1121
    %v1134 = vunpack.c.l.b16 %v1122
    %v1135 = vunpack.c.l.b16 %v1123
    %v1136 = vunpack.c.l.b16 %v1124
    %v1137 = vpack.c.b16 %v1134, %v1133
    %v1138 = vpack.c.b16 %v1136, %v1135
    %v1142 = vsel %vm909, %v1119, 0
    %v1145 = vsel %vm909, %v1120, 0
    %1147 = vmatprep.subr.bf16.mxu0 0
    %1148 = vmatpush1.bf16.msra.mxu0 %v1137
    %1149 = vmatprep.subr.bf16.mxu0 0
    %1150 = vmatpush1.bf16.msra.mxu0 %v1138
    %1151 = vmatprep.subr.bf16.mxu0 0
    %1152 = vmatpush1.bf16.msra.mxu0 0
    %1153 = vmatprep.subr.bf16.mxu0 0
    %1154 = vmatpush1.bf16.msra.mxu0 0
    %1155 = vmatprep.subr.bf16.mxu0 0
    %1156 = vmatpush1.bf16.msra.mxu0 0
    %1157 = vmatprep.subr.bf16.mxu0 0
    %1158 = vmatpush1.bf16.msra.mxu0 0
    %1159 = vmatprep.subr.bf16.mxu0 0
    %1160 = vmatpush1.bf16.msra.mxu0 0
    %1161 = vmatprep.subr.bf16.mxu0 0
    %1162 = vmatpush1.bf16.msra.mxu0 0
    %1163 = vmatprep.subr.bf16.mxu0 0
    %1164 = vmatpush1.bf16.msra.mxu0 0
    %1165 = vmatprep.subr.bf16.mxu0 0
    %1166 = vmatpush1.bf16.msra.mxu0 0
    %1167 = vmatprep.subr.bf16.mxu0 0
    %1168 = vmatpush1.bf16.msra.mxu0 0
    %1169 = vmatprep.subr.bf16.mxu0 0
    %1170 = vmatpush1.bf16.msra.mxu0 0
    %1171 = vmatprep.subr.bf16.mxu0 0
    %1172 = vmatpush1.bf16.msra.mxu0 0
    %1173 = vmatprep.subr.bf16.mxu0 0
    %1174 = vmatpush1.bf16.msra.mxu0 0
    %1175 = vmatprep.subr.bf16.mxu0 0
    %1176 = vmatpush1.bf16.msra.mxu0 0
    %1177 = vmatprep.subr.bf16.mxu0 0
    %1178 = vmatpush1.bf16.msra.mxu0 0
    %1179 = vmatprep.mubr.bf16.mxu0 0
    %1180 = vmatmul.mubr.bf16.gmra.mrb[0].mxu0 %v1142
    %v1181 = vpop.f32.mrb[0].mxu0
    %v1182 = vadd.f32 %v1128, %v1181
    %v1183 = vpop.f32.mrb[0].mxu0
    %v1184 = vpop.f32.mrb[0].mxu0
    %v1185 = vadd.f32 %v1128, %v1184
    %v1186 = vpop.f32.mrb[0].mxu0
    %1187 = vmatprep.mubr.bf16.mxu0 0
    %1188 = vmatmul.mubr.bf16.gmra.mrb[0].mxu0 %v1145
    %v1189 = vpop.f32.mrb[0].mxu0
    %v1190 = vadd.f32 %v1128, %v1189
    %v1191 = vpop.f32.mrb[0].mxu0
    %v1192 = vpop.f32.mrb[0].mxu0
    %v1193 = vadd.f32 %v1128, %v1192
    %v1194 = vpop.f32.mrb[0].mxu0
    %1195 = vdwg.mxu0
    %v1196 = vmax.f32 %v1182, 0.0
    %v1197 = vmax.f32 %v1185, 0.0
    %v1198 = vmax.f32 %v1190, 0.0
    %v1199 = vmax.f32 %v1193, 0.0
    %v1200 = vsel %vm909, %v1196, -inf
    %v1201 = vsel %vm909, %v1197, -inf
    %v1202 = vmax.f32 %v1200, %v1201
    %v1203 = vrot.slane %v1202, 4
    %v1204 = vmax.f32 %v1202, %v1203
    %v1205 = vrot.slane %v1204, 2
    %v1206 = vmax.f32 %v1204, %v1205
    %v1207 = vrot.slane %v1206, 1
    %v1208 = vmax.f32 %v1206, %v1207
    %v1209 = vsel %vm909, %v1198, -inf
    %v1210 = vsel %vm909, %v1199, -inf
    %v1211 = vmax.f32 %v1209, %v1210
    %v1212 = vrot.slane %v1211, 4
    %v1213 = vmax.f32 %v1211, %v1212
    %v1214 = vrot.slane %v1213, 2
    %v1215 = vmax.f32 %v1213, %v1214
    %v1216 = vrot.slane %v1215, 1
    %v1217 = vmax.f32 %v1215, %v1216
    %v1218 = vlaneseq
    %v1219 = vshrl.u32 %v1218, 7
    %vm1220 = vcmp.eq.s32.totalorder %v1219, 1
    %v1221 = vsel %vm1220, %v1217, %v1208
    %v1222 = vpack.c.bf16 %v1221, %v1221
    %v1223 = vld [vmem:[%s1 + $0x50] sm:$0xf]
    %v1224 = vld [vmem:[%s1 + $0x54] sm:$0xf]
    %v1225 = vld [vmem:[%s1 + $0x58] sm:$0xf]
    %v1226 = vld [vmem:[%s1 + $0x5c] sm:$0xf]
    %v1227 = vlaneseq
    %v1228 = vshrl.u32 %v1227, 7
    %v1229 = vsub.s32 6, %v1228
    %v1230 = vrot.slane %v14, %v1229
    %v1235 = vunpack.c.l.b16 %v1223
    %v1236 = vunpack.c.l.b16 %v1224
    %v1237 = vunpack.c.l.b16 %v1225
    %v1238 = vunpack.c.l.b16 %v1226
    %v1239 = vpack.c.b16 %v1236, %v1235
    %v1240 = vpack.c.b16 %v1238, %v1237
    %v1244 = vsel %vm909, %v1222, 0
    %1246 = vmatprep.subr.bf16.mxu0 0
    %1247 = vmatpush1.bf16.msra.mxu0 %v1239
    %1248 = vmatprep.subr.bf16.mxu0 0
    %1249 = vmatpush1.bf16.msra.mxu0 %v1240
    %1250 = vmatprep.subr.bf16.mxu0 0
    %1251 = vmatpush1.bf16.msra.mxu0 0
    %1252 = vmatprep.subr.bf16.mxu0 0
    %1253 = vmatpush1.bf16.msra.mxu0 0
    %1254 = vmatprep.subr.bf16.mxu0 0
    %1255 = vmatpush1.bf16.msra.mxu0 0
    %1256 = vmatprep.subr.bf16.mxu0 0
    %1257 = vmatpush1.bf16.msra.mxu0 0
    %1258 = vmatprep.subr.bf16.mxu0 0
    %1259 = vmatpush1.bf16.msra.mxu0 0
    %1260 = vmatprep.subr.bf16.mxu0 0
    %1261 = vmatpush1.bf16.msra.mxu0 0
    %1262 = vmatprep.subr.bf16.mxu0 0
    %1263 = vmatpush1.bf16.msra.mxu0 0
    %1264 = vmatprep.subr.bf16.mxu0 0
    %1265 = vmatpush1.bf16.msra.mxu0 0
    %1266 = vmatprep.subr.bf16.mxu0 0
    %1267 = vmatpush1.bf16.msra.mxu0 0
    %1268 = vmatprep.subr.bf16.mxu0 0
    %1269 = vmatpush1.bf16.msra.mxu0 0
    %1270 = vmatprep.subr.bf16.mxu0 0
    %1271 = vmatpush1.bf16.msra.mxu0 0
    %1272 = vmatprep.subr.bf16.mxu0 0
    %1273 = vmatpush1.bf16.msra.mxu0 0
    %1274 = vmatprep.subr.bf16.mxu0 0
    %1275 = vmatpush1.bf16.msra.mxu0 0
    %1276 = vmatprep.subr.bf16.mxu0 0
    %1277 = vmatpush1.bf16.msra.mxu0 0
    %1278 = vmatprep.mubr.bf16.mxu0 0
    %1279 = vmatmul.mubr.bf16.gmra.mrb[0].mxu0 %v1244
    %v1280 = vpop.f32.mrb[0].mxu0
    %v1281 = vadd.f32 %v1230, %v1280
    %v1282 = vpop.f32.mrb[0].mxu0
    %v1283 = vpop.f32.mrb[0].mxu0
    %v1284 = vpop.f32.mrb[0].mxu0
    %1285 = vdwg.mxu0
    %v1286 = vmax.f32 %v1281, 0.0
    %vm1287 = vcmask 123904
    %v1288 = vsel %vm1287, %v1286, 0.0
    %1289 = vadd.xlane.f32.xlu0 %v1288
    %v1290 = vpop.xlane.xlu0 %1289
    %v1291 = vrcp.pop 16.0
    %v1292 = vmul.f32 %v1290, %v1291
    %v1293 = vsub.f32 %v1286, %v1292
    %v1294 = vmul.f32 %v1293, %v1293
    %v1295 = vsel %vm1287, %v1294, 0.0
    %1296 = vadd.xlane.f32.xlu0 %v1295
    %v1297 = vpop.xlane.xlu0 %1296
    %v1298 = vmul.f32 %v1297, %v1291
    %v1299 = vadd.f32 %v1298, 1e-12
    %v1300 = vrsqrt.pop %v1299
    %v1301 = vmul.f32 %v1293, %v1300
    %v1302 = vpack.c.bf16 %v1301, %v1301
    %v1303 = vld [vmem:[%s1 + $0x60] sm:$0xf]
    %v1304 = vld [vmem:[%s1 + $0x64] sm:$0xf]
    %v1305 = vlaneseq
    %v1306 = vshrl.u32 %v1305, 7
    %v1307 = vsub.s32 7, %v1306
    %v1308 = vrot.slane %v14, %v1307
    %v1311 = vunpack.c.l.b16 %v1303
    %v1312 = vunpack.c.l.b16 %v1304
    %v1313 = vpack.c.b16 %v1312, %v1311
    %v1316 = vsel %vm79, %v1302, 0
    %1318 = vmatprep.subr.bf16.mxu0 0
    %1319 = vmatpush1.bf16.msra.mxu0 %v1313
    %1320 = vmatprep.subr.bf16.mxu0 0
    %1321 = vmatpush1.bf16.msra.mxu0 0
    %1322 = vmatprep.subr.bf16.mxu0 0
    %1323 = vmatpush1.bf16.msra.mxu0 0
    %1324 = vmatprep.subr.bf16.mxu0 0
    %1325 = vmatpush1.bf16.msra.mxu0 0
    %1326 = vmatprep.subr.bf16.mxu0 0
    %1327 = vmatpush1.bf16.msra.mxu0 0
    %1328 = vmatprep.subr.bf16.mxu0 0
    %1329 = vmatpush1.bf16.msra.mxu0 0
    %1330 = vmatprep.subr.bf16.mxu0 0
    %1331 = vmatpush1.bf16.msra.mxu0 0
    %1332 = vmatprep.subr.bf16.mxu0 0
    %1333 = vmatpush1.bf16.msra.mxu0 0
    %1334 = vmatprep.subr.bf16.mxu0 0
    %1335 = vmatpush1.bf16.msra.mxu0 0
    %1336 = vmatprep.subr.bf16.mxu0 0
    %1337 = vmatpush1.bf16.msra.mxu0 0
    %1338 = vmatprep.subr.bf16.mxu0 0
    %1339 = vmatpush1.bf16.msra.mxu0 0
    %1340 = vmatprep.subr.bf16.mxu0 0
    %1341 = vmatpush1.bf16.msra.mxu0 0
    %1342 = vmatprep.subr.bf16.mxu0 0
    %1343 = vmatpush1.bf16.msra.mxu0 0
    %1344 = vmatprep.subr.bf16.mxu0 0
    %1345 = vmatpush1.bf16.msra.mxu0 0
    %1346 = vmatprep.subr.bf16.mxu0 0
    %1347 = vmatpush1.bf16.msra.mxu0 0
    %1348 = vmatprep.subr.bf16.mxu0 0
    %1349 = vmatpush1.bf16.msra.mxu0 0
    %1350 = vmatprep.mubr.bf16.mxu0 0
    %1351 = vmatmul.mubr.bf16.gmra.mrb[0].mxu0 %v1316
    %v1352 = vpop.f32.mrb[0].mxu0
    %v1353 = vadd.f32 %v1308, %v1352
    %v1354 = vpop.f32.mrb[0].mxu0
    %v1355 = vpop.f32.mrb[0].mxu0
    %v1356 = vpop.f32.mrb[0].mxu0
    %1357 = vdwg.mxu0
    %1358 = vst [vmem:[#allocation2] sm:$0x3] %v1353
    // Predicated region
    $region10: #{_lambda_.1} parent=1 // pred_check
      _
    $region11: #{_lambda_.1} parent=1 // pred_check_branch
      %1360 = sbr.rel (0) target = $region13
    $region12: #{_lambda_.1} parent=1 // pred_region
      %s1362 = ssub.s32 32, 32
      %1363 = vsyncadd [#allocation3], %s1362
      %s1365 = sshll.u32 [#allocation2], 4
      %s1366 = int_to_ptr.vmem [resolvable:$true] %s1365
      %1368 = dma.vmem_to_hbm [thread:$0]  %s1366, 32, %s2, [#allocation3]
    $region13: #{_lambda_.1} parent=1 // pred_fallthru
      _
    // Predicated region
    $region14: #{_lambda_.1} parent=1 // pred_check
      _
    $region15: #{_lambda_.1} parent=1 // pred_check_branch
      %1370 = sbr.rel (0) target = $region17
    $region16: #{_lambda_.1} parent=1 // pred_region
      %1371 = dma.done [#allocation3], 32
    $region17: #{_lambda_.1} parent=1 // pred_fallthru
      _
    %1372 = vsyncpa [#allocation3], 1

</llo_original>
